<compile_context>
chip_gen: v5e
topology: v5e:2x2
jax: 0.10.0
libtpu: 0.0.40
codegen_flags: <defaults>
</compile_context>

<pallas_src>
import jax
import jax.numpy as jnp
from jax.experimental import pallas as pl
from jax.experimental.pallas import tpu as pltpu


def butd_kernel(
    wemb_ref, vflat_ref, v3_ref,
    # packed GRU weights: input->hidden [E,3H], hidden->hidden [H,3H], biases
    wx3_ref, bx3_ref, wh3_ref, bh3_ref,
    # attention / q_net / v_net weights + packed biases (+ scoring vector)
    wva_ref, wq2_ref, wvn_ref, bpack_ref, b2pack_ref,
    # classifier
    wc1_ref, wc2_ref, bc2_ref,
    out_ref,
):
    SB, E = wemb_ref.shape
    B, K, V = v3_ref.shape
    H = wvn_ref.shape[1]
    S = SB // B

    # ---- GRU over the question (PyTorch nn.GRU equations) ----
    # Hoisted input-side projections: one [S*B,E] x [E,3H] matmul.
    # bx3 = [bir+bhr | biz+bhz | bin]  (valid: both biases precede the sigmoid)
    xproj = (jnp.dot(wemb_ref[...], wx3_ref[...],
                     preferred_element_type=jnp.float32) + bx3_ref[...])   # [S*B, 3H]
    wh3 = wh3_ref[...]                                                      # [H, 3H]
    bh3 = bh3_ref[...]                                                      # [1, 3H] = [0 | 0 | bhn]

    h = jnp.zeros((B, H), jnp.float32)
    for t in range(S):   # fully unrolled recurrence (S static & small) -> static slices
        xt = xproj[t * B:(t + 1) * B, :]                                    # [B, 3H]
        hh = jnp.dot(h, wh3, preferred_element_type=jnp.float32) + bh3      # [B, 3H]
        r = jax.nn.sigmoid(xt[:, :H] + hh[:, :H])
        z = jax.nn.sigmoid(xt[:, H:2 * H] + hh[:, H:2 * H])
        n = jnp.tanh(xt[:, 2 * H:] + r * hh[:, 2 * H:])
        h = (1.0 - z) * n + z * h
    q_emb = h                                                               # [B, H]

    # ---- unpack small biases (sublane slices, free-ish) ----
    bpack = bpack_ref[...]                                                  # [3, H]
    bva, bvn, wlin = bpack[0:1], bpack[1:2], bpack[2:3]
    b2pack = b2pack_ref[...]                                                # [2, 2H]
    bq2, bc1 = b2pack[0:1], b2pack[1:2]

    # ---- attention over objects ----
    v_proj = jnp.maximum(
        jnp.dot(vflat_ref[...], wva_ref[...],
                preferred_element_type=jnp.float32) + bva, 0.0)             # [B*K, H]
    v_proj3 = v_proj.reshape(B, K, H)

    # Fused question-side projections: attention q-proj and q_net in ONE matmul.
    q_both = jnp.maximum(
        jnp.dot(q_emb, wq2_ref[...],
                preferred_element_type=jnp.float32) + bq2, 0.0)             # [B, 2H]
    q_proj = q_both[:, :H]                                                  # [B, H]
    q_repr = q_both[:, H:]                                                  # [B, H]

    # Fold scoring vector into the question side; score via batched MXU matmul.
    # (scalar attention bias omitted inside the kernel: softmax is shift-invariant)
    qw = q_proj * wlin                                                      # [B, H]
    att_logits = jnp.einsum('bqh,bkh->bqk', qw[:, None, :], v_proj3,
                            preferred_element_type=jnp.float32)[:, 0, :]    # [B, K]
    m = jnp.max(att_logits, axis=-1, keepdims=True)
    e = jnp.exp(att_logits - m)
    att = e * pl.reciprocal(jnp.sum(e, axis=-1, keepdims=True), approx=True)  # [B, K]

    # ---- attended visual feature: (att * v).sum(1), routed through the MXU ----
    v_emb = jnp.einsum('bqk,bkv->bqv', att[:, None, :], v3_ref[...],
                       preferred_element_type=jnp.float32)[:, 0, :]         # [B, V]

    # ---- joint representation + classifier ----
    v_repr = jnp.maximum(
        jnp.dot(v_emb, wvn_ref[...], preferred_element_type=jnp.float32) + bvn, 0.0)
    joint = q_repr * v_repr
    hid = jnp.maximum(
        jnp.dot(joint, wc1_ref[...], preferred_element_type=jnp.float32) + bc1, 0.0)
    out_ref[...] = (jnp.dot(hid, wc2_ref[...],
                            preferred_element_type=jnp.float32) + bc2_ref[...])  # [B, A_pad]


def base_model_forward(w_emb_sbe, v, params, num_answers):
    S, B, E = w_emb_sbe.shape
    _, K, Vd = v.shape
    H = params["whr"].shape[0]
    A = num_answers
    A_pad = ((A + 127) // 128) * 128          # lane-dense output slab
    f32 = jnp.float32

    # ---- wrapper-side layout plumbing (free) ----
    wemb_flat = w_emb_sbe.reshape(S * B, E)   # seq-major, flattened
    v_flat = v.reshape(B * K, Vd)

    # ---- parameter packing (fewer, larger DMAs) ----
    wx3 = jnp.concatenate([params["wir"], params["wiz"], params["win"]], axis=1)  # [E, 3H]
    wh3 = jnp.concatenate([params["whr"], params["whz"], params["whn"]], axis=1)  # [H, 3H]
    bx3 = jnp.concatenate([params["bir"] + params["bhr"],
                           params["biz"] + params["bhz"],
                           params["bin"]], axis=1)                                # [1, 3H]
    bh3 = jnp.concatenate([jnp.zeros((1, H), f32), jnp.zeros((1, H), f32),
                           params["bhn"]], axis=1)                                # [1, 3H]
    wq2 = jnp.concatenate([params["wqa"], params["wqn"]], axis=1)                 # [H, 2H]
    bq2 = jnp.concatenate([params["bqa"], params["bqn"]], axis=1)                 # [1, 2H]
    b2pack = jnp.concatenate([bq2, params["bc1"]], axis=0)                        # [2, 2H]
    bpack = jnp.concatenate([params["bva"], params["bvn"], params["wlin"]],
                            axis=0)                                               # [3, H]
    wc2p = jnp.pad(params["wc2"], ((0, 0), (0, A_pad - A)))
    bc2p = jnp.pad(params["bc2"], ((0, 0), (0, A_pad - A)))

    ordered = (wemb_flat, v_flat, v,
               wx3, bx3, wh3, bh3,
               params["wva"], wq2, params["wvn"], bpack, b2pack,
               params["wc1"], wc2p, bc2p)
    vmem = pl.BlockSpec(memory_space=pltpu.MemorySpace.VMEM)
    out = pl.pallas_call(
        butd_kernel,
        out_shape=jax.ShapeDtypeStruct((B, A_pad), jnp.float32),
        in_specs=[vmem] * len(ordered),
        out_specs=vmem,
        compiler_params=pltpu.CompilerParams(vmem_limit_bytes=64 * 1024 * 1024),
    )(*ordered)
    return out[:, :A]


def reference_forward(w_emb_sbe, v, params):
    S, B, E = w_emb_sbe.shape
    H = params["whr"].shape[0]
    h = jnp.zeros((B, H), jnp.float32)
    for t in range(S):
        x_t = w_emb_sbe[t]
        r = jax.nn.sigmoid(x_t @ params["wir"] + params["bir"] + h @ params["whr"] + params["bhr"])
        z = jax.nn.sigmoid(x_t @ params["wiz"] + params["biz"] + h @ params["whz"] + params["bhz"])
        n = jnp.tanh(x_t @ params["win"] + params["bin"] + r * (h @ params["whn"] + params["bhn"]))
        h = (1.0 - z) * n + z * h
    q_emb = h
    v_proj = jax.nn.relu(v @ params["wva"] + params["bva"])
    q_proj = jax.nn.relu(q_emb @ params["wqa"] + params["bqa"])
    joint_att = v_proj * q_proj[:, None, :]
    att_logits = jnp.sum(joint_att * params["wlin"][None, :, :], axis=-1) + params["blin"]
    att = jax.nn.softmax(att_logits, axis=-1)
    v_emb = jnp.sum(att[:, :, None] * v, axis=1)
    q_repr = jax.nn.relu(q_emb @ params["wqn"] + params["bqn"])
    v_repr = jax.nn.relu(v_emb @ params["wvn"] + params["bvn"])
    joint = q_repr * v_repr
    hid = jax.nn.relu(joint @ params["wc1"] + params["bc1"])
    return hid @ params["wc2"] + params["bc2"]


def init_params(key, E, H, V, A):
    names_shapes = [
        ("wir", (E, H)), ("wiz", (E, H)), ("win", (E, H)),
        ("whr", (H, H)), ("whz", (H, H)), ("whn", (H, H)),
        ("bir", (1, H)), ("biz", (1, H)), ("bin", (1, H)),
        ("bhr", (1, H)), ("bhz", (1, H)), ("bhn", (1, H)),
        ("wva", (V, H)), ("bva", (1, H)),
        ("wqa", (H, H)), ("bqa", (1, H)),
        ("wlin", (1, H)), ("blin", (1, 1)),
        ("wqn", (H, H)), ("bqn", (1, H)),
        ("wvn", (V, H)), ("bvn", (1, H)),
        ("wc1", (H, 2 * H)), ("bc1", (1, 2 * H)),
        ("wc2", (2 * H, A)), ("bc2", (1, A)),
    ]
    keys = jax.random.split(key, len(names_shapes))
    return {n: 0.1 * jax.random.normal(k, s, jnp.float32)
            for (n, s), k in zip(names_shapes, keys)}


if __name__ == "__main__":
    # B=8 fills the 8 sublanes on batch-rowed ops.
    B, K, V_DIM, B_DIM, S, E, H, A = 8, 16, 32, 4, 8, 32, 32, 16
    VOCAB = 50

    root = jax.random.PRNGKey(0)
    k_emb, k_q, k_v, k_b, k_p = jax.random.split(root, 5)

    emb_table = 0.1 * jax.random.normal(k_emb, (VOCAB + 1, E), jnp.float32)
    q = jax.random.randint(k_q, (B, S), 0, VOCAB)             # token ids
    v = jax.random.normal(k_v, (B, K, V_DIM), jnp.float32)    # object features
    b = jax.random.normal(k_b, (B, K, B_DIM), jnp.float32)    # boxes (unused, as in BaseModel.forward)
    labels = None                                             # unused in forward
    params = init_params(k_p, E, H, V_DIM, A)

    # glue: embedding gather + seq-major transpose, then the fused Pallas kernel
    w_emb = emb_table[q]                                      # [B, S, E]
    w_emb_sbe = jnp.transpose(w_emb, (1, 0, 2))               # [S, B, E]

    logits = base_model_forward(w_emb_sbe, v, params, A)
    logits = jax.block_until_ready(logits)

    ref = reference_forward(w_emb_sbe, v, params)
    assert logits.shape == (B, A)
    # Tolerance loosened slightly vs. the f32 reference: the softmax denominator
    # uses the EUP approximate reciprocal (pl.reciprocal(approx=True)).
    assert jnp.allclose(logits, ref, atol=2e-3, rtol=2e-3), (
        f"max abs err {jnp.max(jnp.abs(logits - ref))}")

    print("KERNEL_OK")
</pallas_src>

<mosaic_0001>
module attributes {stable_mosaic.version = 11 : i64} {
  func.func @butd_kernel(%arg0: memref<64x32xf32, #tpu.memory_space<vmem>>, %arg1: memref<128x32xf32, #tpu.memory_space<vmem>>, %arg2: memref<8x16x32xf32, #tpu.memory_space<vmem>>, %arg3: memref<32x96xf32, #tpu.memory_space<vmem>>, %arg4: memref<1x96xf32, #tpu.memory_space<vmem>>, %arg5: memref<32x96xf32, #tpu.memory_space<vmem>>, %arg6: memref<1x96xf32, #tpu.memory_space<vmem>>, %arg7: memref<32x32xf32, #tpu.memory_space<vmem>>, %arg8: memref<32x64xf32, #tpu.memory_space<vmem>>, %arg9: memref<32x32xf32, #tpu.memory_space<vmem>>, %arg10: memref<3x32xf32, #tpu.memory_space<vmem>>, %arg11: memref<2x64xf32, #tpu.memory_space<vmem>>, %arg12: memref<32x64xf32, #tpu.memory_space<vmem>>, %arg13: memref<64x128xf32, #tpu.memory_space<vmem>>, %arg14: memref<1x128xf32, #tpu.memory_space<vmem>>, %arg15: memref<8x128xf32, #tpu.memory_space<vmem>>) attributes {dimension_semantics = [], scalar_prefetch = 0 : i64, scratch_operands = 0 : i64, tpu.core_type = #tpu.core_type<tc>} {
    %c0 = arith.constant 0 : index
    %c0_0 = arith.constant 0 : index
    %0 = vector.load %arg0[%c0, %c0_0] : memref<64x32xf32, #tpu.memory_space<vmem>>, vector<64x32xf32>
    %c0_1 = arith.constant 0 : index
    %c0_2 = arith.constant 0 : index
    %1 = vector.load %arg3[%c0_1, %c0_2] : memref<32x96xf32, #tpu.memory_space<vmem>>, vector<32x96xf32>
    %cst = arith.constant dense<0.000000e+00> : vector<64x96xf32>
    %2 = tpu.matmul %0, %1, %cst {dimension_numbers = #tpu.dot_dimension_numbers<[1], [0], [0], [1], [0, 0, 1, 1], [], []>} : vector<64x32xf32>, vector<32x96xf32>, vector<64x96xf32> -> vector<64x96xf32>
    %c0_3 = arith.constant 0 : index
    %c0_4 = arith.constant 0 : index
    %3 = vector.load %arg4[%c0_3, %c0_4] : memref<1x96xf32, #tpu.memory_space<vmem>>, vector<1x96xf32>
    %4 = vector.broadcast %3 : vector<1x96xf32> to vector<64x96xf32>
    %5 = arith.addf %2, %4 : vector<64x96xf32>
    %c0_5 = arith.constant 0 : index
    %c0_6 = arith.constant 0 : index
    %6 = vector.load %arg5[%c0_5, %c0_6] : memref<32x96xf32, #tpu.memory_space<vmem>>, vector<32x96xf32>
    %c0_7 = arith.constant 0 : index
    %c0_8 = arith.constant 0 : index
    %7 = vector.load %arg6[%c0_7, %c0_8] : memref<1x96xf32, #tpu.memory_space<vmem>>, vector<1x96xf32>
    %cst_9 = arith.constant 0.000000e+00 : f32
    %8 = vector.broadcast %cst_9 : f32 to vector<8x32xf32>
    %9 = vector.extract_strided_slice %5 {offsets = [0, 0], sizes = [8, 96], strides = [1, 1]} : vector<64x96xf32> to vector<8x96xf32>
    %cst_10 = arith.constant dense<0.000000e+00> : vector<8x96xf32>
    %10 = tpu.matmul %8, %6, %cst_10 {dimension_numbers = #tpu.dot_dimension_numbers<[1], [0], [0], [1], [0, 0, 1, 1], [], []>} : vector<8x32xf32>, vector<32x96xf32>, vector<8x96xf32> -> vector<8x96xf32>
    %11 = vector.broadcast %7 : vector<1x96xf32> to vector<8x96xf32>
    %12 = arith.addf %10, %11 : vector<8x96xf32>
    %13 = vector.extract_strided_slice %9 {offsets = [0, 0], sizes = [8, 32], strides = [1, 1]} : vector<8x96xf32> to vector<8x32xf32>
    %14 = vector.extract_strided_slice %12 {offsets = [0, 0], sizes = [8, 32], strides = [1, 1]} : vector<8x96xf32> to vector<8x32xf32>
    %15 = arith.addf %13, %14 : vector<8x32xf32>
    %16 = arith.negf %15 : vector<8x32xf32>
    %17 = math.exp %16 : vector<8x32xf32>
    %cst_11 = arith.constant 1.000000e+00 : f32
    %18 = vector.broadcast %cst_11 : f32 to vector<8x32xf32>
    %19 = arith.addf %18, %17 : vector<8x32xf32>
    %20 = arith.divf %18, %19 : vector<8x32xf32>
    %21 = vector.extract_strided_slice %9 {offsets = [0, 32], sizes = [8, 32], strides = [1, 1]} : vector<8x96xf32> to vector<8x32xf32>
    %22 = vector.extract_strided_slice %12 {offsets = [0, 32], sizes = [8, 32], strides = [1, 1]} : vector<8x96xf32> to vector<8x32xf32>
    %23 = arith.addf %21, %22 : vector<8x32xf32>
    %24 = arith.negf %23 : vector<8x32xf32>
    %25 = math.exp %24 : vector<8x32xf32>
    %cst_12 = arith.constant 1.000000e+00 : f32
    %26 = vector.broadcast %cst_12 : f32 to vector<8x32xf32>
    %27 = arith.addf %26, %25 : vector<8x32xf32>
    %28 = arith.divf %26, %27 : vector<8x32xf32>
    %29 = vector.extract_strided_slice %9 {offsets = [0, 64], sizes = [8, 32], strides = [1, 1]} : vector<8x96xf32> to vector<8x32xf32>
    %30 = vector.extract_strided_slice %12 {offsets = [0, 64], sizes = [8, 32], strides = [1, 1]} : vector<8x96xf32> to vector<8x32xf32>
    %31 = arith.mulf %20, %30 : vector<8x32xf32>
    %32 = arith.addf %29, %31 : vector<8x32xf32>
    %33 = math.tanh %32 : vector<8x32xf32>
    %cst_13 = arith.constant 1.000000e+00 : f32
    %34 = vector.broadcast %cst_13 : f32 to vector<8x32xf32>
    %35 = arith.subf %34, %28 : vector<8x32xf32>
    %36 = arith.mulf %35, %33 : vector<8x32xf32>
    %37 = arith.mulf %28, %8 : vector<8x32xf32>
    %38 = arith.addf %36, %37 : vector<8x32xf32>
    %39 = vector.extract_strided_slice %5 {offsets = [8, 0], sizes = [8, 96], strides = [1, 1]} : vector<64x96xf32> to vector<8x96xf32>
    %cst_14 = arith.constant dense<0.000000e+00> : vector<8x96xf32>
    %40 = tpu.matmul %38, %6, %cst_14 {dimension_numbers = #tpu.dot_dimension_numbers<[1], [0], [0], [1], [0, 0, 1, 1], [], []>} : vector<8x32xf32>, vector<32x96xf32>, vector<8x96xf32> -> vector<8x96xf32>
    %41 = vector.broadcast %7 : vector<1x96xf32> to vector<8x96xf32>
    %42 = arith.addf %40, %41 : vector<8x96xf32>
    %43 = vector.extract_strided_slice %39 {offsets = [0, 0], sizes = [8, 32], strides = [1, 1]} : vector<8x96xf32> to vector<8x32xf32>
    %44 = vector.extract_strided_slice %42 {offsets = [0, 0], sizes = [8, 32], strides = [1, 1]} : vector<8x96xf32> to vector<8x32xf32>
    %45 = arith.addf %43, %44 : vector<8x32xf32>
    %46 = arith.negf %45 : vector<8x32xf32>
    %47 = math.exp %46 : vector<8x32xf32>
    %cst_15 = arith.constant 1.000000e+00 : f32
    %48 = vector.broadcast %cst_15 : f32 to vector<8x32xf32>
    %49 = arith.addf %48, %47 : vector<8x32xf32>
    %50 = arith.divf %48, %49 : vector<8x32xf32>
    %51 = vector.extract_strided_slice %39 {offsets = [0, 32], sizes = [8, 32], strides = [1, 1]} : vector<8x96xf32> to vector<8x32xf32>
    %52 = vector.extract_strided_slice %42 {offsets = [0, 32], sizes = [8, 32], strides = [1, 1]} : vector<8x96xf32> to vector<8x32xf32>
    %53 = arith.addf %51, %52 : vector<8x32xf32>
    %54 = arith.negf %53 : vector<8x32xf32>
    %55 = math.exp %54 : vector<8x32xf32>
    %cst_16 = arith.constant 1.000000e+00 : f32
    %56 = vector.broadcast %cst_16 : f32 to vector<8x32xf32>
    %57 = arith.addf %56, %55 : vector<8x32xf32>
    %58 = arith.divf %56, %57 : vector<8x32xf32>
    %59 = vector.extract_strided_slice %39 {offsets = [0, 64], sizes = [8, 32], strides = [1, 1]} : vector<8x96xf32> to vector<8x32xf32>
    %60 = vector.extract_strided_slice %42 {offsets = [0, 64], sizes = [8, 32], strides = [1, 1]} : vector<8x96xf32> to vector<8x32xf32>
    %61 = arith.mulf %50, %60 : vector<8x32xf32>
    %62 = arith.addf %59, %61 : vector<8x32xf32>
    %63 = math.tanh %62 : vector<8x32xf32>
    %cst_17 = arith.constant 1.000000e+00 : f32
    %64 = vector.broadcast %cst_17 : f32 to vector<8x32xf32>
    %65 = arith.subf %64, %58 : vector<8x32xf32>
    %66 = arith.mulf %65, %63 : vector<8x32xf32>
    %67 = arith.mulf %58, %38 : vector<8x32xf32>
    %68 = arith.addf %66, %67 : vector<8x32xf32>
    %69 = vector.extract_strided_slice %5 {offsets = [16, 0], sizes = [8, 96], strides = [1, 1]} : vector<64x96xf32> to vector<8x96xf32>
    %cst_18 = arith.constant dense<0.000000e+00> : vector<8x96xf32>
    %70 = tpu.matmul %68, %6, %cst_18 {dimension_numbers = #tpu.dot_dimension_numbers<[1], [0], [0], [1], [0, 0, 1, 1], [], []>} : vector<8x32xf32>, vector<32x96xf32>, vector<8x96xf32> -> vector<8x96xf32>
    %71 = vector.broadcast %7 : vector<1x96xf32> to vector<8x96xf32>
    %72 = arith.addf %70, %71 : vector<8x96xf32>
    %73 = vector.extract_strided_slice %69 {offsets = [0, 0], sizes = [8, 32], strides = [1, 1]} : vector<8x96xf32> to vector<8x32xf32>
    %74 = vector.extract_strided_slice %72 {offsets = [0, 0], sizes = [8, 32], strides = [1, 1]} : vector<8x96xf32> to vector<8x32xf32>
    %75 = arith.addf %73, %74 : vector<8x32xf32>
    %76 = arith.negf %75 : vector<8x32xf32>
    %77 = math.exp %76 : vector<8x32xf32>
    %cst_19 = arith.constant 1.000000e+00 : f32
    %78 = vector.broadcast %cst_19 : f32 to vector<8x32xf32>
    %79 = arith.addf %78, %77 : vector<8x32xf32>
    %80 = arith.divf %78, %79 : vector<8x32xf32>
    %81 = vector.extract_strided_slice %69 {offsets = [0, 32], sizes = [8, 32], strides = [1, 1]} : vector<8x96xf32> to vector<8x32xf32>
    %82 = vector.extract_strided_slice %72 {offsets = [0, 32], sizes = [8, 32], strides = [1, 1]} : vector<8x96xf32> to vector<8x32xf32>
    %83 = arith.addf %81, %82 : vector<8x32xf32>
    %84 = arith.negf %83 : vector<8x32xf32>
    %85 = math.exp %84 : vector<8x32xf32>
    %cst_20 = arith.constant 1.000000e+00 : f32
    %86 = vector.broadcast %cst_20 : f32 to vector<8x32xf32>
    %87 = arith.addf %86, %85 : vector<8x32xf32>
    %88 = arith.divf %86, %87 : vector<8x32xf32>
    %89 = vector.extract_strided_slice %69 {offsets = [0, 64], sizes = [8, 32], strides = [1, 1]} : vector<8x96xf32> to vector<8x32xf32>
    %90 = vector.extract_strided_slice %72 {offsets = [0, 64], sizes = [8, 32], strides = [1, 1]} : vector<8x96xf32> to vector<8x32xf32>
    %91 = arith.mulf %80, %90 : vector<8x32xf32>
    %92 = arith.addf %89, %91 : vector<8x32xf32>
    %93 = math.tanh %92 : vector<8x32xf32>
    %cst_21 = arith.constant 1.000000e+00 : f32
    %94 = vector.broadcast %cst_21 : f32 to vector<8x32xf32>
    %95 = arith.subf %94, %88 : vector<8x32xf32>
    %96 = arith.mulf %95, %93 : vector<8x32xf32>
    %97 = arith.mulf %88, %68 : vector<8x32xf32>
    %98 = arith.addf %96, %97 : vector<8x32xf32>
    %99 = vector.extract_strided_slice %5 {offsets = [24, 0], sizes = [8, 96], strides = [1, 1]} : vector<64x96xf32> to vector<8x96xf32>
    %cst_22 = arith.constant dense<0.000000e+00> : vector<8x96xf32>
    %100 = tpu.matmul %98, %6, %cst_22 {dimension_numbers = #tpu.dot_dimension_numbers<[1], [0], [0], [1], [0, 0, 1, 1], [], []>} : vector<8x32xf32>, vector<32x96xf32>, vector<8x96xf32> -> vector<8x96xf32>
    %101 = vector.broadcast %7 : vector<1x96xf32> to vector<8x96xf32>
    %102 = arith.addf %100, %101 : vector<8x96xf32>
    %103 = vector.extract_strided_slice %99 {offsets = [0, 0], sizes = [8, 32], strides = [1, 1]} : vector<8x96xf32> to vector<8x32xf32>
    %104 = vector.extract_strided_slice %102 {offsets = [0, 0], sizes = [8, 32], strides = [1, 1]} : vector<8x96xf32> to vector<8x32xf32>
    %105 = arith.addf %103, %104 : vector<8x32xf32>
    %106 = arith.negf %105 : vector<8x32xf32>
    %107 = math.exp %106 : vector<8x32xf32>
    %cst_23 = arith.constant 1.000000e+00 : f32
    %108 = vector.broadcast %cst_23 : f32 to vector<8x32xf32>
    %109 = arith.addf %108, %107 : vector<8x32xf32>
    %110 = arith.divf %108, %109 : vector<8x32xf32>
    %111 = vector.extract_strided_slice %99 {offsets = [0, 32], sizes = [8, 32], strides = [1, 1]} : vector<8x96xf32> to vector<8x32xf32>
    %112 = vector.extract_strided_slice %102 {offsets = [0, 32], sizes = [8, 32], strides = [1, 1]} : vector<8x96xf32> to vector<8x32xf32>
    %113 = arith.addf %111, %112 : vector<8x32xf32>
    %114 = arith.negf %113 : vector<8x32xf32>
    %115 = math.exp %114 : vector<8x32xf32>
    %cst_24 = arith.constant 1.000000e+00 : f32
    %116 = vector.broadcast %cst_24 : f32 to vector<8x32xf32>
    %117 = arith.addf %116, %115 : vector<8x32xf32>
    %118 = arith.divf %116, %117 : vector<8x32xf32>
    %119 = vector.extract_strided_slice %99 {offsets = [0, 64], sizes = [8, 32], strides = [1, 1]} : vector<8x96xf32> to vector<8x32xf32>
    %120 = vector.extract_strided_slice %102 {offsets = [0, 64], sizes = [8, 32], strides = [1, 1]} : vector<8x96xf32> to vector<8x32xf32>
    %121 = arith.mulf %110, %120 : vector<8x32xf32>
    %122 = arith.addf %119, %121 : vector<8x32xf32>
    %123 = math.tanh %122 : vector<8x32xf32>
    %cst_25 = arith.constant 1.000000e+00 : f32
    %124 = vector.broadcast %cst_25 : f32 to vector<8x32xf32>
    %125 = arith.subf %124, %118 : vector<8x32xf32>
    %126 = arith.mulf %125, %123 : vector<8x32xf32>
    %127 = arith.mulf %118, %98 : vector<8x32xf32>
    %128 = arith.addf %126, %127 : vector<8x32xf32>
    %129 = vector.extract_strided_slice %5 {offsets = [32, 0], sizes = [8, 96], strides = [1, 1]} : vector<64x96xf32> to vector<8x96xf32>
    %cst_26 = arith.constant dense<0.000000e+00> : vector<8x96xf32>
    %130 = tpu.matmul %128, %6, %cst_26 {dimension_numbers = #tpu.dot_dimension_numbers<[1], [0], [0], [1], [0, 0, 1, 1], [], []>} : vector<8x32xf32>, vector<32x96xf32>, vector<8x96xf32> -> vector<8x96xf32>
    %131 = vector.broadcast %7 : vector<1x96xf32> to vector<8x96xf32>
    %132 = arith.addf %130, %131 : vector<8x96xf32>
    %133 = vector.extract_strided_slice %129 {offsets = [0, 0], sizes = [8, 32], strides = [1, 1]} : vector<8x96xf32> to vector<8x32xf32>
    %134 = vector.extract_strided_slice %132 {offsets = [0, 0], sizes = [8, 32], strides = [1, 1]} : vector<8x96xf32> to vector<8x32xf32>
    %135 = arith.addf %133, %134 : vector<8x32xf32>
    %136 = arith.negf %135 : vector<8x32xf32>
    %137 = math.exp %136 : vector<8x32xf32>
    %cst_27 = arith.constant 1.000000e+00 : f32
    %138 = vector.broadcast %cst_27 : f32 to vector<8x32xf32>
    %139 = arith.addf %138, %137 : vector<8x32xf32>
    %140 = arith.divf %138, %139 : vector<8x32xf32>
    %141 = vector.extract_strided_slice %129 {offsets = [0, 32], sizes = [8, 32], strides = [1, 1]} : vector<8x96xf32> to vector<8x32xf32>
    %142 = vector.extract_strided_slice %132 {offsets = [0, 32], sizes = [8, 32], strides = [1, 1]} : vector<8x96xf32> to vector<8x32xf32>
    %143 = arith.addf %141, %142 : vector<8x32xf32>
    %144 = arith.negf %143 : vector<8x32xf32>
    %145 = math.exp %144 : vector<8x32xf32>
    %cst_28 = arith.constant 1.000000e+00 : f32
    %146 = vector.broadcast %cst_28 : f32 to vector<8x32xf32>
    %147 = arith.addf %146, %145 : vector<8x32xf32>
    %148 = arith.divf %146, %147 : vector<8x32xf32>
    %149 = vector.extract_strided_slice %129 {offsets = [0, 64], sizes = [8, 32], strides = [1, 1]} : vector<8x96xf32> to vector<8x32xf32>
    %150 = vector.extract_strided_slice %132 {offsets = [0, 64], sizes = [8, 32], strides = [1, 1]} : vector<8x96xf32> to vector<8x32xf32>
    %151 = arith.mulf %140, %150 : vector<8x32xf32>
    %152 = arith.addf %149, %151 : vector<8x32xf32>
    %153 = math.tanh %152 : vector<8x32xf32>
    %cst_29 = arith.constant 1.000000e+00 : f32
    %154 = vector.broadcast %cst_29 : f32 to vector<8x32xf32>
    %155 = arith.subf %154, %148 : vector<8x32xf32>
    %156 = arith.mulf %155, %153 : vector<8x32xf32>
    %157 = arith.mulf %148, %128 : vector<8x32xf32>
    %158 = arith.addf %156, %157 : vector<8x32xf32>
    %159 = vector.extract_strided_slice %5 {offsets = [40, 0], sizes = [8, 96], strides = [1, 1]} : vector<64x96xf32> to vector<8x96xf32>
    %cst_30 = arith.constant dense<0.000000e+00> : vector<8x96xf32>
    %160 = tpu.matmul %158, %6, %cst_30 {dimension_numbers = #tpu.dot_dimension_numbers<[1], [0], [0], [1], [0, 0, 1, 1], [], []>} : vector<8x32xf32>, vector<32x96xf32>, vector<8x96xf32> -> vector<8x96xf32>
    %161 = vector.broadcast %7 : vector<1x96xf32> to vector<8x96xf32>
    %162 = arith.addf %160, %161 : vector<8x96xf32>
    %163 = vector.extract_strided_slice %159 {offsets = [0, 0], sizes = [8, 32], strides = [1, 1]} : vector<8x96xf32> to vector<8x32xf32>
    %164 = vector.extract_strided_slice %162 {offsets = [0, 0], sizes = [8, 32], strides = [1, 1]} : vector<8x96xf32> to vector<8x32xf32>
    %165 = arith.addf %163, %164 : vector<8x32xf32>
    %166 = arith.negf %165 : vector<8x32xf32>
    %167 = math.exp %166 : vector<8x32xf32>
    %cst_31 = arith.constant 1.000000e+00 : f32
    %168 = vector.broadcast %cst_31 : f32 to vector<8x32xf32>
    %169 = arith.addf %168, %167 : vector<8x32xf32>
    %170 = arith.divf %168, %169 : vector<8x32xf32>
    %171 = vector.extract_strided_slice %159 {offsets = [0, 32], sizes = [8, 32], strides = [1, 1]} : vector<8x96xf32> to vector<8x32xf32>
    %172 = vector.extract_strided_slice %162 {offsets = [0, 32], sizes = [8, 32], strides = [1, 1]} : vector<8x96xf32> to vector<8x32xf32>
    %173 = arith.addf %171, %172 : vector<8x32xf32>
    %174 = arith.negf %173 : vector<8x32xf32>
    %175 = math.exp %174 : vector<8x32xf32>
    %cst_32 = arith.constant 1.000000e+00 : f32
    %176 = vector.broadcast %cst_32 : f32 to vector<8x32xf32>
    %177 = arith.addf %176, %175 : vector<8x32xf32>
    %178 = arith.divf %176, %177 : vector<8x32xf32>
    %179 = vector.extract_strided_slice %159 {offsets = [0, 64], sizes = [8, 32], strides = [1, 1]} : vector<8x96xf32> to vector<8x32xf32>
    %180 = vector.extract_strided_slice %162 {offsets = [0, 64], sizes = [8, 32], strides = [1, 1]} : vector<8x96xf32> to vector<8x32xf32>
    %181 = arith.mulf %170, %180 : vector<8x32xf32>
    %182 = arith.addf %179, %181 : vector<8x32xf32>
    %183 = math.tanh %182 : vector<8x32xf32>
    %cst_33 = arith.constant 1.000000e+00 : f32
    %184 = vector.broadcast %cst_33 : f32 to vector<8x32xf32>
    %185 = arith.subf %184, %178 : vector<8x32xf32>
    %186 = arith.mulf %185, %183 : vector<8x32xf32>
    %187 = arith.mulf %178, %158 : vector<8x32xf32>
    %188 = arith.addf %186, %187 : vector<8x32xf32>
    %189 = vector.extract_strided_slice %5 {offsets = [48, 0], sizes = [8, 96], strides = [1, 1]} : vector<64x96xf32> to vector<8x96xf32>
    %cst_34 = arith.constant dense<0.000000e+00> : vector<8x96xf32>
    %190 = tpu.matmul %188, %6, %cst_34 {dimension_numbers = #tpu.dot_dimension_numbers<[1], [0], [0], [1], [0, 0, 1, 1], [], []>} : vector<8x32xf32>, vector<32x96xf32>, vector<8x96xf32> -> vector<8x96xf32>
    %191 = vector.broadcast %7 : vector<1x96xf32> to vector<8x96xf32>
    %192 = arith.addf %190, %191 : vector<8x96xf32>
    %193 = vector.extract_strided_slice %189 {offsets = [0, 0], sizes = [8, 32], strides = [1, 1]} : vector<8x96xf32> to vector<8x32xf32>
    %194 = vector.extract_strided_slice %192 {offsets = [0, 0], sizes = [8, 32], strides = [1, 1]} : vector<8x96xf32> to vector<8x32xf32>
    %195 = arith.addf %193, %194 : vector<8x32xf32>
    %196 = arith.negf %195 : vector<8x32xf32>
    %197 = math.exp %196 : vector<8x32xf32>
    %cst_35 = arith.constant 1.000000e+00 : f32
    %198 = vector.broadcast %cst_35 : f32 to vector<8x32xf32>
    %199 = arith.addf %198, %197 : vector<8x32xf32>
    %200 = arith.divf %198, %199 : vector<8x32xf32>
    %201 = vector.extract_strided_slice %189 {offsets = [0, 32], sizes = [8, 32], strides = [1, 1]} : vector<8x96xf32> to vector<8x32xf32>
    %202 = vector.extract_strided_slice %192 {offsets = [0, 32], sizes = [8, 32], strides = [1, 1]} : vector<8x96xf32> to vector<8x32xf32>
    %203 = arith.addf %201, %202 : vector<8x32xf32>
    %204 = arith.negf %203 : vector<8x32xf32>
    %205 = math.exp %204 : vector<8x32xf32>
    %cst_36 = arith.constant 1.000000e+00 : f32
    %206 = vector.broadcast %cst_36 : f32 to vector<8x32xf32>
    %207 = arith.addf %206, %205 : vector<8x32xf32>
    %208 = arith.divf %206, %207 : vector<8x32xf32>
    %209 = vector.extract_strided_slice %189 {offsets = [0, 64], sizes = [8, 32], strides = [1, 1]} : vector<8x96xf32> to vector<8x32xf32>
    %210 = vector.extract_strided_slice %192 {offsets = [0, 64], sizes = [8, 32], strides = [1, 1]} : vector<8x96xf32> to vector<8x32xf32>
    %211 = arith.mulf %200, %210 : vector<8x32xf32>
    %212 = arith.addf %209, %211 : vector<8x32xf32>
    %213 = math.tanh %212 : vector<8x32xf32>
    %cst_37 = arith.constant 1.000000e+00 : f32
    %214 = vector.broadcast %cst_37 : f32 to vector<8x32xf32>
    %215 = arith.subf %214, %208 : vector<8x32xf32>
    %216 = arith.mulf %215, %213 : vector<8x32xf32>
    %217 = arith.mulf %208, %188 : vector<8x32xf32>
    %218 = arith.addf %216, %217 : vector<8x32xf32>
    %219 = vector.extract_strided_slice %5 {offsets = [56, 0], sizes = [8, 96], strides = [1, 1]} : vector<64x96xf32> to vector<8x96xf32>
    %cst_38 = arith.constant dense<0.000000e+00> : vector<8x96xf32>
    %220 = tpu.matmul %218, %6, %cst_38 {dimension_numbers = #tpu.dot_dimension_numbers<[1], [0], [0], [1], [0, 0, 1, 1], [], []>} : vector<8x32xf32>, vector<32x96xf32>, vector<8x96xf32> -> vector<8x96xf32>
    %221 = vector.broadcast %7 : vector<1x96xf32> to vector<8x96xf32>
    %222 = arith.addf %220, %221 : vector<8x96xf32>
    %223 = vector.extract_strided_slice %219 {offsets = [0, 0], sizes = [8, 32], strides = [1, 1]} : vector<8x96xf32> to vector<8x32xf32>
    %224 = vector.extract_strided_slice %222 {offsets = [0, 0], sizes = [8, 32], strides = [1, 1]} : vector<8x96xf32> to vector<8x32xf32>
    %225 = arith.addf %223, %224 : vector<8x32xf32>
    %226 = arith.negf %225 : vector<8x32xf32>
    %227 = math.exp %226 : vector<8x32xf32>
    %cst_39 = arith.constant 1.000000e+00 : f32
    %228 = vector.broadcast %cst_39 : f32 to vector<8x32xf32>
    %229 = arith.addf %228, %227 : vector<8x32xf32>
    %230 = arith.divf %228, %229 : vector<8x32xf32>
    %231 = vector.extract_strided_slice %219 {offsets = [0, 32], sizes = [8, 32], strides = [1, 1]} : vector<8x96xf32> to vector<8x32xf32>
    %232 = vector.extract_strided_slice %222 {offsets = [0, 32], sizes = [8, 32], strides = [1, 1]} : vector<8x96xf32> to vector<8x32xf32>
    %233 = arith.addf %231, %232 : vector<8x32xf32>
    %234 = arith.negf %233 : vector<8x32xf32>
    %235 = math.exp %234 : vector<8x32xf32>
    %cst_40 = arith.constant 1.000000e+00 : f32
    %236 = vector.broadcast %cst_40 : f32 to vector<8x32xf32>
    %237 = arith.addf %236, %235 : vector<8x32xf32>
    %238 = arith.divf %236, %237 : vector<8x32xf32>
    %239 = vector.extract_strided_slice %219 {offsets = [0, 64], sizes = [8, 32], strides = [1, 1]} : vector<8x96xf32> to vector<8x32xf32>
    %240 = vector.extract_strided_slice %222 {offsets = [0, 64], sizes = [8, 32], strides = [1, 1]} : vector<8x96xf32> to vector<8x32xf32>
    %241 = arith.mulf %230, %240 : vector<8x32xf32>
    %242 = arith.addf %239, %241 : vector<8x32xf32>
    %243 = math.tanh %242 : vector<8x32xf32>
    %cst_41 = arith.constant 1.000000e+00 : f32
    %244 = vector.broadcast %cst_41 : f32 to vector<8x32xf32>
    %245 = arith.subf %244, %238 : vector<8x32xf32>
    %246 = arith.mulf %245, %243 : vector<8x32xf32>
    %247 = arith.mulf %238, %218 : vector<8x32xf32>
    %248 = arith.addf %246, %247 : vector<8x32xf32>
    %c0_42 = arith.constant 0 : index
    %c0_43 = arith.constant 0 : index
    %249 = vector.load %arg10[%c0_42, %c0_43] : memref<3x32xf32, #tpu.memory_space<vmem>>, vector<3x32xf32>
    %250 = vector.extract_strided_slice %249 {offsets = [0, 0], sizes = [1, 32], strides = [1, 1]} : vector<3x32xf32> to vector<1x32xf32>
    %251 = vector.extract_strided_slice %249 {offsets = [1, 0], sizes = [1, 32], strides = [1, 1]} : vector<3x32xf32> to vector<1x32xf32>
    %252 = vector.extract_strided_slice %249 {offsets = [2, 0], sizes = [1, 32], strides = [1, 1]} : vector<3x32xf32> to vector<1x32xf32>
    %c0_44 = arith.constant 0 : index
    %c0_45 = arith.constant 0 : index
    %253 = vector.load %arg11[%c0_44, %c0_45] : memref<2x64xf32, #tpu.memory_space<vmem>>, vector<2x64xf32>
    %254 = vector.extract_strided_slice %253 {offsets = [0, 0], sizes = [1, 64], strides = [1, 1]} : vector<2x64xf32> to vector<1x64xf32>
    %255 = vector.extract_strided_slice %253 {offsets = [1, 0], sizes = [1, 64], strides = [1, 1]} : vector<2x64xf32> to vector<1x64xf32>
    %c0_46 = arith.constant 0 : index
    %c0_47 = arith.constant 0 : index
    %256 = vector.load %arg1[%c0_46, %c0_47] : memref<128x32xf32, #tpu.memory_space<vmem>>, vector<128x32xf32>
    %c0_48 = arith.constant 0 : index
    %c0_49 = arith.constant 0 : index
    %257 = vector.load %arg7[%c0_48, %c0_49] : memref<32x32xf32, #tpu.memory_space<vmem>>, vector<32x32xf32>
    %cst_50 = arith.constant dense<0.000000e+00> : vector<128x32xf32>
    %258 = tpu.matmul %256, %257, %cst_50 {dimension_numbers = #tpu.dot_dimension_numbers<[1], [0], [0], [1], [0, 0, 1, 1], [], []>} : vector<128x32xf32>, vector<32x32xf32>, vector<128x32xf32> -> vector<128x32xf32>
    %259 = vector.broadcast %250 : vector<1x32xf32> to vector<128x32xf32>
    %260 = arith.addf %258, %259 : vector<128x32xf32>
    %cst_51 = arith.constant 0.000000e+00 : f32
    %261 = vector.broadcast %cst_51 : f32 to vector<128x32xf32>
    %262 = arith.maximumf %260, %261 : vector<128x32xf32>
    %263 = vector.shape_cast %262 : vector<128x32xf32> to vector<8x16x32xf32>
    %c0_52 = arith.constant 0 : index
    %c0_53 = arith.constant 0 : index
    %264 = vector.load %arg8[%c0_52, %c0_53] : memref<32x64xf32, #tpu.memory_space<vmem>>, vector<32x64xf32>
    %cst_54 = arith.constant dense<0.000000e+00> : vector<8x64xf32>
    %265 = tpu.matmul %248, %264, %cst_54 {dimension_numbers = #tpu.dot_dimension_numbers<[1], [0], [0], [1], [0, 0, 1, 1], [], []>} : vector<8x32xf32>, vector<32x64xf32>, vector<8x64xf32> -> vector<8x64xf32>
    %266 = vector.broadcast %254 : vector<1x64xf32> to vector<8x64xf32>
    %267 = arith.addf %265, %266 : vector<8x64xf32>
    %cst_55 = arith.constant 0.000000e+00 : f32
    %268 = vector.broadcast %cst_55 : f32 to vector<8x64xf32>
    %269 = arith.maximumf %267, %268 : vector<8x64xf32>
    %270 = vector.extract_strided_slice %269 {offsets = [0, 0], sizes = [8, 32], strides = [1, 1]} : vector<8x64xf32> to vector<8x32xf32>
    %271 = vector.extract_strided_slice %269 {offsets = [0, 32], sizes = [8, 32], strides = [1, 1]} : vector<8x64xf32> to vector<8x32xf32>
    %272 = vector.broadcast %252 : vector<1x32xf32> to vector<8x32xf32>
    %273 = arith.mulf %270, %272 : vector<8x32xf32>
    %274 = vector.shape_cast %273 : vector<8x32xf32> to vector<8x1x32xf32>
    "tpu.trace_start"() <{level = 10 : i32, message = "bqh,bkh->bqk"}> : () -> ()
    %cst_56 = arith.constant dense<0.000000e+00> : vector<8x1x16xf32>
    %275 = tpu.matmul %274, %263, %cst_56 {dimension_numbers = #tpu.dot_dimension_numbers<[2], [2], [1], [1], [0, 0, 0, 1, 1, 1], [0], [0]>} : vector<8x1x32xf32>, vector<8x16x32xf32>, vector<8x1x16xf32> -> vector<8x1x16xf32>
    "tpu.trace_stop"() : () -> ()
    %276 = vector.shape_cast %275 : vector<8x1x16xf32> to vector<8x16xf32>
    %cst_57 = arith.constant dense<0xFF800000> : vector<8xf32>
    %277 = vector.multi_reduction <maximumf>, %276, %cst_57 [1] : vector<8x16xf32> to vector<8xf32>
    %278 = vector.shape_cast %277 : vector<8xf32> to vector<8x1xf32>
    %279 = vector.broadcast %278 : vector<8x1xf32> to vector<8x16xf32>
    %280 = arith.subf %276, %279 : vector<8x16xf32>
    %281 = math.exp %280 : vector<8x16xf32>
    %cst_58 = arith.constant dense<0.000000e+00> : vector<8xf32>
    %282 = vector.multi_reduction <add>, %281, %cst_58 [1] : vector<8x16xf32> to vector<8xf32>
    %283 = vector.shape_cast %282 : vector<8xf32> to vector<8x1xf32>
    %284 = tpu.reciprocal %283 {approx = true} : vector<8x1xf32> -> vector<8x1xf32>
    %285 = vector.broadcast %284 : vector<8x1xf32> to vector<8x16xf32>
    %286 = arith.mulf %281, %285 : vector<8x16xf32>
    %287 = vector.shape_cast %286 : vector<8x16xf32> to vector<8x1x16xf32>
    %c0_59 = arith.constant 0 : index
    %c0_60 = arith.constant 0 : index
    %c0_61 = arith.constant 0 : index
    %288 = vector.load %arg2[%c0_59, %c0_60, %c0_61] : memref<8x16x32xf32, #tpu.memory_space<vmem>>, vector<8x16x32xf32>
    "tpu.trace_start"() <{level = 10 : i32, message = "bqk,bkv->bqv"}> : () -> ()
    %cst_62 = arith.constant dense<0.000000e+00> : vector<8x1x32xf32>
    %289 = tpu.matmul %287, %288, %cst_62 {dimension_numbers = #tpu.dot_dimension_numbers<[2], [1], [1], [2], [0, 0, 0, 1, 1, 2], [0], [0]>} : vector<8x1x16xf32>, vector<8x16x32xf32>, vector<8x1x32xf32> -> vector<8x1x32xf32>
    "tpu.trace_stop"() : () -> ()
    %290 = vector.shape_cast %289 : vector<8x1x32xf32> to vector<8x32xf32>
    %c0_63 = arith.constant 0 : index
    %c0_64 = arith.constant 0 : index
    %291 = vector.load %arg9[%c0_63, %c0_64] : memref<32x32xf32, #tpu.memory_space<vmem>>, vector<32x32xf32>
    %cst_65 = arith.constant dense<0.000000e+00> : vector<8x32xf32>
    %292 = tpu.matmul %290, %291, %cst_65 {dimension_numbers = #tpu.dot_dimension_numbers<[1], [0], [0], [1], [0, 0, 1, 1], [], []>} : vector<8x32xf32>, vector<32x32xf32>, vector<8x32xf32> -> vector<8x32xf32>
    %293 = vector.broadcast %251 : vector<1x32xf32> to vector<8x32xf32>
    %294 = arith.addf %292, %293 : vector<8x32xf32>
    %cst_66 = arith.constant 0.000000e+00 : f32
    %295 = vector.broadcast %cst_66 : f32 to vector<8x32xf32>
    %296 = arith.maximumf %294, %295 : vector<8x32xf32>
    %297 = arith.mulf %271, %296 : vector<8x32xf32>
    %c0_67 = arith.constant 0 : index
    %c0_68 = arith.constant 0 : index
    %298 = vector.load %arg12[%c0_67, %c0_68] : memref<32x64xf32, #tpu.memory_space<vmem>>, vector<32x64xf32>
    %cst_69 = arith.constant dense<0.000000e+00> : vector<8x64xf32>
    %299 = tpu.matmul %297, %298, %cst_69 {dimension_numbers = #tpu.dot_dimension_numbers<[1], [0], [0], [1], [0, 0, 1, 1], [], []>} : vector<8x32xf32>, vector<32x64xf32>, vector<8x64xf32> -> vector<8x64xf32>
    %300 = vector.broadcast %255 : vector<1x64xf32> to vector<8x64xf32>
    %301 = arith.addf %299, %300 : vector<8x64xf32>
    %cst_70 = arith.constant 0.000000e+00 : f32
    %302 = vector.broadcast %cst_70 : f32 to vector<8x64xf32>
    %303 = arith.maximumf %301, %302 : vector<8x64xf32>
    %c0_71 = arith.constant 0 : index
    %c0_72 = arith.constant 0 : index
    %304 = vector.load %arg13[%c0_71, %c0_72] : memref<64x128xf32, #tpu.memory_space<vmem>>, vector<64x128xf32>
    %cst_73 = arith.constant dense<0.000000e+00> : vector<8x128xf32>
    %305 = tpu.matmul %303, %304, %cst_73 {dimension_numbers = #tpu.dot_dimension_numbers<[1], [0], [0], [1], [0, 0, 1, 1], [], []>} : vector<8x64xf32>, vector<64x128xf32>, vector<8x128xf32> -> vector<8x128xf32>
    %c0_74 = arith.constant 0 : index
    %c0_75 = arith.constant 0 : index
    %306 = vector.load %arg14[%c0_74, %c0_75] : memref<1x128xf32, #tpu.memory_space<vmem>>, vector<1x128xf32>
    %307 = vector.broadcast %306 : vector<1x128xf32> to vector<8x128xf32>
    %308 = arith.addf %305, %307 : vector<8x128xf32>
    %c0_76 = arith.constant 0 : index
    %c0_77 = arith.constant 0 : index
    %309 = vector.load %arg15[%c0_76, %c0_77] : memref<8x128xf32, #tpu.memory_space<vmem>>, vector<8x128xf32>
    tpu.vector_store %arg15[%c0_76, %c0_77], %308 {strides = array<i32>} : memref<8x128xf32, #tpu.memory_space<vmem>>, vector<8x128xf32>,
    return
  }
}

</mosaic_0001>

<llo_original>
// kernel: tpu_custom_call.1
$region0: #{tpu_custom_call.1}
  #allocation0 [shape = 'u32[]', space=smem, size = 0x4, offset = 0x4, fixed_abs, tag = 'smem constant byte address 0x4 - core index']
  #allocation1 [shape = 'u32[72,128]{1,0:T(1,128)}', space=vmem, size = 0x9000, scoped, tag = 'internal scratch']
  %s0 = inlined_call_operand.vmem [shape: f32[64,32], index: 0, kind: input, shape index: {}]
  %s1 = inlined_call_operand.vmem [shape: f32[128,32], index: 1, kind: input, shape index: {}]
  %s2 = inlined_call_operand.vmem [shape: f32[8,16,32], index: 2, kind: input, shape index: {}]
  %s3 = inlined_call_operand.vmem [shape: f32[32,96], index: 3, kind: input, shape index: {}]
  %s4 = inlined_call_operand.vmem [shape: f32[1,96], index: 4, kind: input, shape index: {}]
  %s5 = inlined_call_operand.hbm [shape: f32[32,96], index: 5, kind: input, shape index: {}]
  %s6 = inlined_call_operand.hbm [shape: f32[1,96], index: 6, kind: input, shape index: {}]
  %s7 = inlined_call_operand.hbm [shape: f32[32,32], index: 7, kind: input, shape index: {}]
  %s8 = inlined_call_operand.hbm [shape: f32[32,64], index: 8, kind: input, shape index: {}]
  %s9 = inlined_call_operand.hbm [shape: f32[32,32], index: 9, kind: input, shape index: {}]
  %s10 = inlined_call_operand.vmem [shape: f32[3,32], index: 10, kind: input, shape index: {}]
  %s11 = inlined_call_operand.vmem [shape: f32[2,64], index: 11, kind: input, shape index: {}]
  %s12 = inlined_call_operand.hbm [shape: f32[32,64], index: 12, kind: input, shape index: {}]
  %s13 = inlined_call_operand.vmem [shape: f32[64,128], index: 13, kind: input, shape index: {}]
  %s14 = inlined_call_operand.vmem [shape: f32[1,128], index: 14, kind: input, shape index: {}]
  %s15 = inlined_call_operand.hbm [shape: f32[8,128], index: 15, kind: output, shape index: {}]
  %s16 = sld [smem:[#allocation0]]
  $region94: #{tpu_custom_call.1} parent=0
    _
  %s18 = ssub.s32 1, %s16
  %s19 = scalar_select 0, %s18, %s16
  $region1: #{tpu_custom_call.1} parent=0
    #allocation2 [shape = 'u8[16384]{0}', space=vmem, size = 0x4000, scoped, tag = 'input window, operand 5, single buffered']
    #allocation3 [shape = 's32[1]{0}', space=sflag, size = 0x4, scoped, tag = 'scoped memory for tpu_custom_call.1']
    #allocation4 [shape = 's32[1]{0}', space=sflag, size = 0x4, scoped, tag = 'scoped memory for tpu_custom_call.1']
    #allocation5 [shape = 'u8[512]{0}', space=vmem, size = 0x400, scoped, tag = 'input window, operand 6, single buffered']
    #allocation6 [shape = 's32[1]{0}', space=sflag, size = 0x4, scoped, tag = 'scoped memory for tpu_custom_call.1']
    #allocation7 [shape = 'u8[16384]{0}', space=vmem, size = 0x4000, scoped, tag = 'input window, operand 7, single buffered']
    #allocation8 [shape = 'u8[16384]{0}', space=vmem, size = 0x4000, scoped, tag = 'input window, operand 8, single buffered']
    #allocation9 [shape = 's32[1]{0}', space=sflag, size = 0x4, scoped, tag = 'scoped memory for tpu_custom_call.1']
    #allocation10 [shape = 'u8[16384]{0}', space=vmem, size = 0x4000, scoped, tag = 'input window, operand 9, single buffered']
    #allocation11 [shape = 'u8[16384]{0}', space=vmem, size = 0x4000, scoped, tag = 'input window, operand 12, single buffered']
    #allocation12 [shape = 's32[1]{0}', space=sflag, size = 0x4, scoped, tag = 'scoped memory for tpu_custom_call.1']
    #allocation13 [shape = 'u8[4096]{0}', space=vmem, size = 0x1000, scoped, tag = 'output window, operand 0, single buffered']
    %20 = vsyncpa [#allocation3], 0
    %21 = vsyncpa [#allocation6], 0
    %22 = vsyncpa [#allocation9], 0
    %23 = vsyncpa [#allocation12], 0
    %24 = vsyncpa [#allocation4], 0
    // Predicated region
    $region2: #{tpu_custom_call.1} parent=1 // pred_check
      _
    $region3: #{tpu_custom_call.1} parent=1 // pred_check_branch
      %26 = sbr.rel (0) target = $region5
    $region4: #{tpu_custom_call.1} parent=1 // pred_region
      _
    $region5: #{tpu_custom_call.1} parent=1 // pred_fallthru
      _
    // Predicated region
    $region6: #{tpu_custom_call.1} parent=1 // pred_check
      _
    $region7: #{tpu_custom_call.1} parent=1 // pred_check_branch
      %28 = sbr.rel (0) target = $region9
    $region8: #{tpu_custom_call.1} parent=1 // pred_region
      _
    $region9: #{tpu_custom_call.1} parent=1 // pred_fallthru
      _
    // Predicated region
    $region10: #{tpu_custom_call.1} parent=1 // pred_check
      _
    $region11: #{tpu_custom_call.1} parent=1 // pred_check_branch
      %30 = sbr.rel (0) target = $region13
    $region12: #{tpu_custom_call.1} parent=1 // pred_region
      _
    $region13: #{tpu_custom_call.1} parent=1 // pred_fallthru
      _
    // Predicated region
    $region14: #{tpu_custom_call.1} parent=1 // pred_check
      _
    $region15: #{tpu_custom_call.1} parent=1 // pred_check_branch
      %32 = sbr.rel (0) target = $region17
    $region16: #{tpu_custom_call.1} parent=1 // pred_region
      _
    $region17: #{tpu_custom_call.1} parent=1 // pred_fallthru
      _
    // Predicated region
    $region18: #{tpu_custom_call.1} parent=1 // pred_check
      _
    $region19: #{tpu_custom_call.1} parent=1 // pred_check_branch
      %34 = sbr.rel (0) target = $region21
    $region20: #{tpu_custom_call.1} parent=1 // pred_region
      _
    $region21: #{tpu_custom_call.1} parent=1 // pred_fallthru
      _
    // Predicated region
    $region22: #{tpu_custom_call.1} parent=1 // pred_check
      _
    $region23: #{tpu_custom_call.1} parent=1 // pred_check_branch
      %36 = sbr.rel (0) target = $region25
    $region24: #{tpu_custom_call.1} parent=1 // pred_region
      %38 = vsyncadd [#allocation3], 0
      %s39 = sshll.u32 %s5, 4
      %s40 = int_to_ptr.hbm [resolvable:$true] %s39
      %s41 = sshll.u32 [#allocation2], 4
      %s42 = int_to_ptr.vmem [resolvable:$true] %s41
      %47 = dma.hbm_to_vmem [thread:$0]  %s40, 512, %s42, [#allocation3], 128, 128, 8
    $region25: #{tpu_custom_call.1} parent=1 // pred_fallthru
      _
    // Predicated region
    $region26: #{tpu_custom_call.1} parent=1 // pred_check
      _
    $region27: #{tpu_custom_call.1} parent=1 // pred_check_branch
      %49 = sbr.rel (0) target = $region29
    $region28: #{tpu_custom_call.1} parent=1 // pred_region
      %51 = vsyncadd [#allocation6], 0
      %s53 = sshll.u32 %s6, 4
      %s54 = int_to_ptr.hbm [resolvable:$true] %s53
      %s55 = sshll.u32 [#allocation5], 4
      %s56 = int_to_ptr.vmem [resolvable:$true] %s55
      %58 = dma.hbm_to_vmem [thread:$0]  %s54, 16, %s56, [#allocation6]
    $region29: #{tpu_custom_call.1} parent=1 // pred_fallthru
      _
    // Predicated region
    $region30: #{tpu_custom_call.1} parent=1 // pred_check
      _
    $region31: #{tpu_custom_call.1} parent=1 // pred_check_branch
      %60 = sbr.rel (0) target = $region33
    $region32: #{tpu_custom_call.1} parent=1 // pred_region
      %62 = vsyncadd [#allocation6], 0
      %s63 = sshll.u32 %s7, 4
      %s64 = int_to_ptr.hbm [resolvable:$true] %s63
      %s65 = sshll.u32 [#allocation7], 4
      %s66 = int_to_ptr.vmem [resolvable:$true] %s65
      %71 = dma.hbm_to_vmem [thread:$0]  %s64, 512, %s66, [#allocation6], 128, 128, 8
    $region33: #{tpu_custom_call.1} parent=1 // pred_fallthru
      _
    // Predicated region
    $region34: #{tpu_custom_call.1} parent=1 // pred_check
      _
    $region35: #{tpu_custom_call.1} parent=1 // pred_check_branch
      %73 = sbr.rel (0) target = $region37
    $region36: #{tpu_custom_call.1} parent=1 // pred_region
      %75 = vsyncadd [#allocation9], 0
      %s76 = sshll.u32 %s8, 4
      %s77 = int_to_ptr.hbm [resolvable:$true] %s76
      %s78 = sshll.u32 [#allocation8], 4
      %s79 = int_to_ptr.vmem [resolvable:$true] %s78
      %84 = dma.hbm_to_vmem [thread:$0]  %s77, 512, %s79, [#allocation9], 128, 128, 8
    $region37: #{tpu_custom_call.1} parent=1 // pred_fallthru
      _
    // Predicated region
    $region38: #{tpu_custom_call.1} parent=1 // pred_check
      _
    $region39: #{tpu_custom_call.1} parent=1 // pred_check_branch
      %86 = sbr.rel (0) target = $region41
    $region40: #{tpu_custom_call.1} parent=1 // pred_region
      %88 = vsyncadd [#allocation9], 0
      %s89 = sshll.u32 %s9, 4
      %s90 = int_to_ptr.hbm [resolvable:$true] %s89
      %s91 = sshll.u32 [#allocation10], 4
      %s92 = int_to_ptr.vmem [resolvable:$true] %s91
      %97 = dma.hbm_to_vmem [thread:$0]  %s90, 512, %s92, [#allocation9], 128, 128, 8
    $region41: #{tpu_custom_call.1} parent=1 // pred_fallthru
      _
    // Predicated region
    $region42: #{tpu_custom_call.1} parent=1 // pred_check
      _
    $region43: #{tpu_custom_call.1} parent=1 // pred_check_branch
      %99 = sbr.rel (0) target = $region45
    $region44: #{tpu_custom_call.1} parent=1 // pred_region
      _
    $region45: #{tpu_custom_call.1} parent=1 // pred_fallthru
      _
    // Predicated region
    $region46: #{tpu_custom_call.1} parent=1 // pred_check
      _
    $region47: #{tpu_custom_call.1} parent=1 // pred_check_branch
      %101 = sbr.rel (0) target = $region49
    $region48: #{tpu_custom_call.1} parent=1 // pred_region
      _
    $region49: #{tpu_custom_call.1} parent=1 // pred_fallthru
      _
    // Predicated region
    $region50: #{tpu_custom_call.1} parent=1 // pred_check
      _
    $region51: #{tpu_custom_call.1} parent=1 // pred_check_branch
      %103 = sbr.rel (0) target = $region53
    $region52: #{tpu_custom_call.1} parent=1 // pred_region
      %105 = vsyncadd [#allocation12], 0
      %s106 = sshll.u32 %s12, 4
      %s107 = int_to_ptr.hbm [resolvable:$true] %s106
      %s108 = sshll.u32 [#allocation11], 4
      %s109 = int_to_ptr.vmem [resolvable:$true] %s108
      %114 = dma.hbm_to_vmem [thread:$0]  %s107, 512, %s109, [#allocation12], 128, 128, 8
    $region53: #{tpu_custom_call.1} parent=1 // pred_fallthru
      _
    // Predicated region
    $region54: #{tpu_custom_call.1} parent=1 // pred_check
      _
    $region55: #{tpu_custom_call.1} parent=1 // pred_check_branch
      %116 = sbr.rel (0) target = $region57
    $region56: #{tpu_custom_call.1} parent=1 // pred_region
      _
    $region57: #{tpu_custom_call.1} parent=1 // pred_fallthru
      _
    // Predicated region
    $region58: #{tpu_custom_call.1} parent=1 // pred_check
      _
    $region59: #{tpu_custom_call.1} parent=1 // pred_check_branch
      %118 = sbr.rel (0) target = $region61
    $region60: #{tpu_custom_call.1} parent=1 // pred_region
      _
    $region61: #{tpu_custom_call.1} parent=1 // pred_fallthru
      _
    // Predicated region
    $region62: #{tpu_custom_call.1} parent=1 // pred_check
      _
    $region63: #{tpu_custom_call.1} parent=1 // pred_check_branch
      %120 = sbr.rel (0) target = $region65
    $region64: #{tpu_custom_call.1} parent=1 // pred_region
      %122 = dma.done [#allocation3], 512
    $region65: #{tpu_custom_call.1} parent=1 // pred_fallthru
      _
    // Predicated region
    $region66: #{tpu_custom_call.1} parent=1 // pred_check
      _
    $region67: #{tpu_custom_call.1} parent=1 // pred_check_branch
      %124 = sbr.rel (0) target = $region69
    $region68: #{tpu_custom_call.1} parent=1 // pred_region
      %126 = dma.done [#allocation6], 16
    $region69: #{tpu_custom_call.1} parent=1 // pred_fallthru
      _
    // Predicated region
    $region70: #{tpu_custom_call.1} parent=1 // pred_check
      _
    $region71: #{tpu_custom_call.1} parent=1 // pred_check_branch
      %128 = sbr.rel (0) target = $region73
    $region72: #{tpu_custom_call.1} parent=1 // pred_region
      %130 = dma.done [#allocation6], 512
    $region73: #{tpu_custom_call.1} parent=1 // pred_fallthru
      _
    // Predicated region
    $region74: #{tpu_custom_call.1} parent=1 // pred_check
      _
    $region75: #{tpu_custom_call.1} parent=1 // pred_check_branch
      %132 = sbr.rel (0) target = $region77
    $region76: #{tpu_custom_call.1} parent=1 // pred_region
      %134 = dma.done [#allocation9], 512
    $region77: #{tpu_custom_call.1} parent=1 // pred_fallthru
      _
    // Predicated region
    $region78: #{tpu_custom_call.1} parent=1 // pred_check
      _
    $region79: #{tpu_custom_call.1} parent=1 // pred_check_branch
      %136 = sbr.rel (0) target = $region81
    $region80: #{tpu_custom_call.1} parent=1 // pred_region
      %138 = dma.done [#allocation9], 512
    $region81: #{tpu_custom_call.1} parent=1 // pred_fallthru
      _
    // Predicated region
    $region82: #{tpu_custom_call.1} parent=1 // pred_check
      _
    $region83: #{tpu_custom_call.1} parent=1 // pred_check_branch
      %140 = sbr.rel (0) target = $region85
    $region84: #{tpu_custom_call.1} parent=1 // pred_region
      %142 = dma.done [#allocation12], 512
    $region85: #{tpu_custom_call.1} parent=1 // pred_fallthru
      _
    %v143 = vld [vmem:[%s0] sm:$0xff]
    %v144 = vld [vmem:[%s0 + $0x8] sm:$0xff]
    %v145 = vld [vmem:[%s0 + $0x10] sm:$0xff]
    %v146 = vld [vmem:[%s0 + $0x18] sm:$0xff]
    %v147 = vld [vmem:[%s0 + $0x20] sm:$0xff]
    %v148 = vld [vmem:[%s0 + $0x28] sm:$0xff]
    %v149 = vld [vmem:[%s0 + $0x30] sm:$0xff]
    %v150 = vld [vmem:[%s0 + $0x38] sm:$0xff]
    %v151 = vld [vmem:[%s3] sm:$0xff]
    %v152 = vld [vmem:[%s3 + $0x8] sm:$0xff]
    %v153 = vld [vmem:[%s3 + $0x10] sm:$0xff]
    %v154 = vld [vmem:[%s3 + $0x18] sm:$0xff]
    %v155 = vld [vmem:[%s4] sm:$0x1]
    %v157 = vperm.slane %v155, 0
    %vm159 = vcmask 261120
    %v161 = vsel %vm159, %v143, 0
    %v164 = vsel %vm159, %v144, 0
    %v167 = vsel %vm159, %v145, 0
    %v170 = vsel %vm159, %v146, 0
    %v173 = vsel %vm159, %v147, 0
    %v176 = vsel %vm159, %v148, 0
    %v179 = vsel %vm159, %v149, 0
    %v182 = vsel %vm159, %v150, 0
    %184 = vmatpush.msra.mxu0 0.0
    %185 = vmatpush.msra.mxu0 0.0
    %186 = vmatpush.msra.mxu0 0.0
    %187 = vmatpush.msra.mxu0 0.0
    %188 = vmatpush.msra.mxu0 0.0
    %189 = vmatpush.msra.mxu0 0.0
    %190 = vmatpush.msra.mxu0 0.0
    %191 = vmatpush.msra.mxu0 0.0
    %192 = vmatpush.msra.mxu0 0.0
    %193 = vmatpush.msra.mxu0 0.0
    %194 = vmatpush.msra.mxu0 0.0
    %195 = vmatpush.msra.mxu0 0.0
    %196 = vmatpush.msra.mxu0 %v154
    %197 = vmatpush.msra.mxu0 %v153
    %198 = vmatpush.msra.mxu0 %v152
    %199 = vmatpush.msra.mxu0 %v151
    %200 = vmatmul.f32.gmra.mxu0 %v161
    %v201 = vpop.f32.mrf.mxu0
    %v202 = vadd.f32 %v157, %v201
    %203 = vmatmul.f32.gmra.mxu0 %v164
    %v204 = vpop.f32.mrf.mxu0
    %v205 = vadd.f32 %v157, %v204
    %206 = vmatmul.f32.gmra.mxu0 %v167
    %v207 = vpop.f32.mrf.mxu0
    %v208 = vadd.f32 %v157, %v207
    %209 = vmatmul.f32.gmra.mxu0 %v170
    %v210 = vpop.f32.mrf.mxu0
    %v211 = vadd.f32 %v157, %v210
    %212 = vmatmul.f32.gmra.mxu0 %v173
    %v213 = vpop.f32.mrf.mxu0
    %v214 = vadd.f32 %v157, %v213
    %215 = vmatmul.f32.gmra.mxu0 %v176
    %v216 = vpop.f32.mrf.mxu0
    %v217 = vadd.f32 %v157, %v216
    %218 = vmatmul.f32.gmra.mxu0 %v179
    %v219 = vpop.f32.mrf.mxu0
    %v220 = vadd.f32 %v157, %v219
    %221 = vmatmul.f32.gmra.mxu0 %v182
    %v222 = vpop.f32.mrf.mxu0
    %v223 = vadd.f32 %v157, %v222
    %224 = vdwg.mxu0
    %v225 = vld [vmem:[#allocation2] sm:$0xff]
    %v226 = vld [vmem:[#allocation2 + $0x8] sm:$0xff]
    %v227 = vld [vmem:[#allocation2 + $0x10] sm:$0xff]
    %v228 = vld [vmem:[#allocation2 + $0x18] sm:$0xff]
    %v229 = vld [vmem:[#allocation5] sm:$0x1]
    %v231 = vperm.slane %v229, 0
    %v234 = vsel %vm159, 0.0, 0
    %236 = vmatpush.msra.mxu0 0.0
    %237 = vmatpush.msra.mxu0 0.0
    %238 = vmatpush.msra.mxu0 0.0
    %239 = vmatpush.msra.mxu0 0.0
    %240 = vmatpush.msra.mxu0 0.0
    %241 = vmatpush.msra.mxu0 0.0
    %242 = vmatpush.msra.mxu0 0.0
    %243 = vmatpush.msra.mxu0 0.0
    %244 = vmatpush.msra.mxu0 0.0
    %245 = vmatpush.msra.mxu0 0.0
    %246 = vmatpush.msra.mxu0 0.0
    %247 = vmatpush.msra.mxu0 0.0
    %248 = vmatpush.msra.mxu0 %v228
    %249 = vmatpush.msra.mxu0 %v227
    %250 = vmatpush.msra.mxu0 %v226
    %251 = vmatpush.msra.mxu0 %v225
    %252 = vmatmul.f32.gmra.mxu0 %v234
    %v253 = vpop.f32.mrf.mxu0
    %v254 = vadd.f32 %v231, %v253
    %255 = vdwg.mxu0
    %v256 = vadd.f32 %v202, %v254
    %v257 = vxor.u32 %v256, 2147483648
    %v258 = vmul.f32 %v257, 1.442695
    %v259 = vpow.pop %v258
    %v260 = vadd.f32 %v259, 1.0
    %v261 = vrcp.pop %v260
    %v262 = vmul.f32 %v260, %v261
    %v263 = vsub.f32 1.0, %v262
    %v264 = vmul.f32 %v261, %v263
    %v265 = vadd.f32 %v261, %v264
    %vm266 = vweird.f32 %v260
    %vm267 = vweird.f32 %v261
    %vm268 = vmor %vm266, %vm267
    %v269 = vsel %vm268, %v261, %v265
    %v270 = vand.u32 2147483647, %v260
    %vm271 = vcmp.eq.f32.partialorder %v270, 8.507059e+37
    %v272 = vand.u32 %v260, 2147483648
    %v273 = vor.u32 1.1754944e-38, %v272
    %v274 = vsel %vm271, %v273, %v269
    %v275 = vmul.f32 1.0, %v274
    %277 = vrot.lane.b32.xlu0 %v254, 64
    %v278 = vpop.permute.xlu0 %277
    %v280 = vmul.f32 %v275, %v278
    %282 = vrot.lane.b32.xlu0 %v280, 64
    %v283 = vpop.permute.xlu0 %282
    %v285 = vadd.f32 %v202, %v283
    %v286 = vtanh.pop %v285
    %v287 = vsub.f32 1.0, %v275
    %289 = vrot.lane.b32.xlu0 %v286, 96
    %v290 = vpop.permute.xlu0 %289
    %v292 = vmul.f32 %v287, %v290
    %v293 = vmul.f32 %v275, 0.0
    %v294 = vadd.f32 %v292, %v293
    %296 = vrot.lane.b32.xlu0 %v294, 96
    %v297 = vpop.permute.xlu0 %296
    %v298 = vsel %vm159, %v297, 0
    %300 = vmatpush.msra.mxu0 0.0
    %301 = vmatpush.msra.mxu0 0.0
    %302 = vmatpush.msra.mxu0 0.0
    %303 = vmatpush.msra.mxu0 0.0
    %304 = vmatpush.msra.mxu0 0.0
    %305 = vmatpush.msra.mxu0 0.0
    %306 = vmatpush.msra.mxu0 0.0
    %307 = vmatpush.msra.mxu0 0.0
    %308 = vmatpush.msra.mxu0 0.0
    %309 = vmatpush.msra.mxu0 0.0
    %310 = vmatpush.msra.mxu0 0.0
    %311 = vmatpush.msra.mxu0 0.0
    %312 = vmatpush.msra.mxu0 %v228
    %313 = vmatpush.msra.mxu0 %v227
    %314 = vmatpush.msra.mxu0 %v226
    %315 = vmatpush.msra.mxu0 %v225
    %316 = vmatmul.f32.gmra.mxu0 %v298
    %v317 = vpop.f32.mrf.mxu0
    %v318 = vadd.f32 %v231, %v317
    %319 = vdwg.mxu0
    %v320 = vadd.f32 %v205, %v318
    %v321 = vxor.u32 %v320, 2147483648
    %v322 = vmul.f32 %v321, 1.442695
    %v323 = vpow.pop %v322
    %v324 = vadd.f32 %v323, 1.0
    %v325 = vrcp.pop %v324
    %v326 = vmul.f32 %v324, %v325
    %v327 = vsub.f32 1.0, %v326
    %v328 = vmul.f32 %v325, %v327
    %v329 = vadd.f32 %v325, %v328
    %vm330 = vweird.f32 %v324
    %vm331 = vweird.f32 %v325
    %vm332 = vmor %vm330, %vm331
    %v333 = vsel %vm332, %v325, %v329
    %v334 = vand.u32 2147483647, %v324
    %vm335 = vcmp.eq.f32.partialorder %v334, 8.507059e+37
    %v336 = vand.u32 %v324, 2147483648
    %v337 = vor.u32 1.1754944e-38, %v336
    %v338 = vsel %vm335, %v337, %v333
    %v339 = vmul.f32 1.0, %v338
    %341 = vrot.lane.b32.xlu0 %v318, 64
    %v342 = vpop.permute.xlu0 %341
    %v344 = vmul.f32 %v339, %v342
    %346 = vrot.lane.b32.xlu0 %v344, 64
    %v347 = vpop.permute.xlu0 %346
    %v349 = vadd.f32 %v205, %v347
    %v350 = vtanh.pop %v349
    %v351 = vsub.f32 1.0, %v339
    %353 = vrot.lane.b32.xlu0 %v350, 96
    %v354 = vpop.permute.xlu0 %353
    %v356 = vmul.f32 %v351, %v354
    %v357 = vmul.f32 %v339, %v294
    %v358 = vadd.f32 %v356, %v357
    %360 = vrot.lane.b32.xlu0 %v358, 96
    %v361 = vpop.permute.xlu0 %360
    %v362 = vsel %vm159, %v361, 0
    %364 = vmatpush.msra.mxu0 0.0
    %365 = vmatpush.msra.mxu0 0.0
    %366 = vmatpush.msra.mxu0 0.0
    %367 = vmatpush.msra.mxu0 0.0
    %368 = vmatpush.msra.mxu0 0.0
    %369 = vmatpush.msra.mxu0 0.0
    %370 = vmatpush.msra.mxu0 0.0
    %371 = vmatpush.msra.mxu0 0.0
    %372 = vmatpush.msra.mxu0 0.0
    %373 = vmatpush.msra.mxu0 0.0
    %374 = vmatpush.msra.mxu0 0.0
    %375 = vmatpush.msra.mxu0 0.0
    %376 = vmatpush.msra.mxu0 %v228
    %377 = vmatpush.msra.mxu0 %v227
    %378 = vmatpush.msra.mxu0 %v226
    %379 = vmatpush.msra.mxu0 %v225
    %380 = vmatmul.f32.gmra.mxu0 %v362
    %v381 = vpop.f32.mrf.mxu0
    %v382 = vadd.f32 %v231, %v381
    %383 = vdwg.mxu0
    %v384 = vadd.f32 %v208, %v382
    %v385 = vxor.u32 %v384, 2147483648
    %v386 = vmul.f32 %v385, 1.442695
    %v387 = vpow.pop %v386
    %v388 = vadd.f32 %v387, 1.0
    %v389 = vrcp.pop %v388
    %v390 = vmul.f32 %v388, %v389
    %v391 = vsub.f32 1.0, %v390
    %v392 = vmul.f32 %v389, %v391
    %v393 = vadd.f32 %v389, %v392
    %vm394 = vweird.f32 %v388
    %vm395 = vweird.f32 %v389
    %vm396 = vmor %vm394, %vm395
    %v397 = vsel %vm396, %v389, %v393
    %v398 = vand.u32 2147483647, %v388
    %vm399 = vcmp.eq.f32.partialorder %v398, 8.507059e+37
    %v400 = vand.u32 %v388, 2147483648
    %v401 = vor.u32 1.1754944e-38, %v400
    %v402 = vsel %vm399, %v401, %v397
    %v403 = vmul.f32 1.0, %v402
    %405 = vrot.lane.b32.xlu0 %v382, 64
    %v406 = vpop.permute.xlu0 %405
    %v408 = vmul.f32 %v403, %v406
    %410 = vrot.lane.b32.xlu0 %v408, 64
    %v411 = vpop.permute.xlu0 %410
    %v413 = vadd.f32 %v208, %v411
    %v414 = vtanh.pop %v413
    %v415 = vsub.f32 1.0, %v403
    %417 = vrot.lane.b32.xlu0 %v414, 96
    %v418 = vpop.permute.xlu0 %417
    %v420 = vmul.f32 %v415, %v418
    %v421 = vmul.f32 %v403, %v358
    %v422 = vadd.f32 %v420, %v421
    %424 = vrot.lane.b32.xlu0 %v422, 96
    %v425 = vpop.permute.xlu0 %424
    %v426 = vsel %vm159, %v425, 0
    %428 = vmatpush.msra.mxu0 0.0
    %429 = vmatpush.msra.mxu0 0.0
    %430 = vmatpush.msra.mxu0 0.0
    %431 = vmatpush.msra.mxu0 0.0
    %432 = vmatpush.msra.mxu0 0.0
    %433 = vmatpush.msra.mxu0 0.0
    %434 = vmatpush.msra.mxu0 0.0
    %435 = vmatpush.msra.mxu0 0.0
    %436 = vmatpush.msra.mxu0 0.0
    %437 = vmatpush.msra.mxu0 0.0
    %438 = vmatpush.msra.mxu0 0.0
    %439 = vmatpush.msra.mxu0 0.0
    %440 = vmatpush.msra.mxu0 %v228
    %441 = vmatpush.msra.mxu0 %v227
    %442 = vmatpush.msra.mxu0 %v226
    %443 = vmatpush.msra.mxu0 %v225
    %444 = vmatmul.f32.gmra.mxu0 %v426
    %v445 = vpop.f32.mrf.mxu0
    %v446 = vadd.f32 %v231, %v445
    %447 = vdwg.mxu0
    %v448 = vadd.f32 %v211, %v446
    %v449 = vxor.u32 %v448, 2147483648
    %v450 = vmul.f32 %v449, 1.442695
    %v451 = vpow.pop %v450
    %v452 = vadd.f32 %v451, 1.0
    %v453 = vrcp.pop %v452
    %v454 = vmul.f32 %v452, %v453
    %v455 = vsub.f32 1.0, %v454
    %v456 = vmul.f32 %v453, %v455
    %v457 = vadd.f32 %v453, %v456
    %vm458 = vweird.f32 %v452
    %vm459 = vweird.f32 %v453
    %vm460 = vmor %vm458, %vm459
    %v461 = vsel %vm460, %v453, %v457
    %v462 = vand.u32 2147483647, %v452
    %vm463 = vcmp.eq.f32.partialorder %v462, 8.507059e+37
    %v464 = vand.u32 %v452, 2147483648
    %v465 = vor.u32 1.1754944e-38, %v464
    %v466 = vsel %vm463, %v465, %v461
    %v467 = vmul.f32 1.0, %v466
    %469 = vrot.lane.b32.xlu0 %v446, 64
    %v470 = vpop.permute.xlu0 %469
    %v472 = vmul.f32 %v467, %v470
    %474 = vrot.lane.b32.xlu0 %v472, 64
    %v475 = vpop.permute.xlu0 %474
    %v477 = vadd.f32 %v211, %v475
    %v478 = vtanh.pop %v477
    %v479 = vsub.f32 1.0, %v467
    %481 = vrot.lane.b32.xlu0 %v478, 96
    %v482 = vpop.permute.xlu0 %481
    %v484 = vmul.f32 %v479, %v482
    %v485 = vmul.f32 %v467, %v422
    %v486 = vadd.f32 %v484, %v485
    %488 = vrot.lane.b32.xlu0 %v486, 96
    %v489 = vpop.permute.xlu0 %488
    %v490 = vsel %vm159, %v489, 0
    %492 = vmatpush.msra.mxu0 0.0
    %493 = vmatpush.msra.mxu0 0.0
    %494 = vmatpush.msra.mxu0 0.0
    %495 = vmatpush.msra.mxu0 0.0
    %496 = vmatpush.msra.mxu0 0.0
    %497 = vmatpush.msra.mxu0 0.0
    %498 = vmatpush.msra.mxu0 0.0
    %499 = vmatpush.msra.mxu0 0.0
    %500 = vmatpush.msra.mxu0 0.0
    %501 = vmatpush.msra.mxu0 0.0
    %502 = vmatpush.msra.mxu0 0.0
    %503 = vmatpush.msra.mxu0 0.0
    %504 = vmatpush.msra.mxu0 %v228
    %505 = vmatpush.msra.mxu0 %v227
    %506 = vmatpush.msra.mxu0 %v226
    %507 = vmatpush.msra.mxu0 %v225
    %508 = vmatmul.f32.gmra.mxu0 %v490
    %v509 = vpop.f32.mrf.mxu0
    %v510 = vadd.f32 %v231, %v509
    %511 = vdwg.mxu0
    %v512 = vadd.f32 %v214, %v510
    %v513 = vxor.u32 %v512, 2147483648
    %v514 = vmul.f32 %v513, 1.442695
    %v515 = vpow.pop %v514
    %v516 = vadd.f32 %v515, 1.0
    %v517 = vrcp.pop %v516
    %v518 = vmul.f32 %v516, %v517
    %v519 = vsub.f32 1.0, %v518
    %v520 = vmul.f32 %v517, %v519
    %v521 = vadd.f32 %v517, %v520
    %vm522 = vweird.f32 %v516
    %vm523 = vweird.f32 %v517
    %vm524 = vmor %vm522, %vm523
    %v525 = vsel %vm524, %v517, %v521
    %v526 = vand.u32 2147483647, %v516
    %vm527 = vcmp.eq.f32.partialorder %v526, 8.507059e+37
    %v528 = vand.u32 %v516, 2147483648
    %v529 = vor.u32 1.1754944e-38, %v528
    %v530 = vsel %vm527, %v529, %v525
    %v531 = vmul.f32 1.0, %v530
    %533 = vrot.lane.b32.xlu0 %v510, 64
    %v534 = vpop.permute.xlu0 %533
    %v536 = vmul.f32 %v531, %v534
    %538 = vrot.lane.b32.xlu0 %v536, 64
    %v539 = vpop.permute.xlu0 %538
    %v541 = vadd.f32 %v214, %v539
    %v542 = vtanh.pop %v541
    %v543 = vsub.f32 1.0, %v531
    %545 = vrot.lane.b32.xlu0 %v542, 96
    %v546 = vpop.permute.xlu0 %545
    %v548 = vmul.f32 %v543, %v546
    %v549 = vmul.f32 %v531, %v486
    %v550 = vadd.f32 %v548, %v549
    %552 = vrot.lane.b32.xlu0 %v550, 96
    %v553 = vpop.permute.xlu0 %552
    %v554 = vsel %vm159, %v553, 0
    %556 = vmatpush.msra.mxu0 0.0
    %557 = vmatpush.msra.mxu0 0.0
    %558 = vmatpush.msra.mxu0 0.0
    %559 = vmatpush.msra.mxu0 0.0
    %560 = vmatpush.msra.mxu0 0.0
    %561 = vmatpush.msra.mxu0 0.0
    %562 = vmatpush.msra.mxu0 0.0
    %563 = vmatpush.msra.mxu0 0.0
    %564 = vmatpush.msra.mxu0 0.0
    %565 = vmatpush.msra.mxu0 0.0
    %566 = vmatpush.msra.mxu0 0.0
    %567 = vmatpush.msra.mxu0 0.0
    %568 = vmatpush.msra.mxu0 %v228
    %569 = vmatpush.msra.mxu0 %v227
    %570 = vmatpush.msra.mxu0 %v226
    %571 = vmatpush.msra.mxu0 %v225
    %572 = vmatmul.f32.gmra.mxu0 %v554
    %v573 = vpop.f32.mrf.mxu0
    %v574 = vadd.f32 %v231, %v573
    %575 = vdwg.mxu0
    %v576 = vadd.f32 %v217, %v574
    %v577 = vxor.u32 %v576, 2147483648
    %v578 = vmul.f32 %v577, 1.442695
    %v579 = vpow.pop %v578
    %v580 = vadd.f32 %v579, 1.0
    %v581 = vrcp.pop %v580
    %v582 = vmul.f32 %v580, %v581
    %v583 = vsub.f32 1.0, %v582
    %v584 = vmul.f32 %v581, %v583
    %v585 = vadd.f32 %v581, %v584
    %vm586 = vweird.f32 %v580
    %vm587 = vweird.f32 %v581
    %vm588 = vmor %vm586, %vm587
    %v589 = vsel %vm588, %v581, %v585
    %v590 = vand.u32 2147483647, %v580
    %vm591 = vcmp.eq.f32.partialorder %v590, 8.507059e+37
    %v592 = vand.u32 %v580, 2147483648
    %v593 = vor.u32 1.1754944e-38, %v592
    %v594 = vsel %vm591, %v593, %v589
    %v595 = vmul.f32 1.0, %v594
    %597 = vrot.lane.b32.xlu0 %v574, 64
    %v598 = vpop.permute.xlu0 %597
    %v600 = vmul.f32 %v595, %v598
    %602 = vrot.lane.b32.xlu0 %v600, 64
    %v603 = vpop.permute.xlu0 %602
    %v605 = vadd.f32 %v217, %v603
    %v606 = vtanh.pop %v605
    %v607 = vsub.f32 1.0, %v595
    %609 = vrot.lane.b32.xlu0 %v606, 96
    %v610 = vpop.permute.xlu0 %609
    %v612 = vmul.f32 %v607, %v610
    %v613 = vmul.f32 %v595, %v550
    %v614 = vadd.f32 %v612, %v613
    %616 = vrot.lane.b32.xlu0 %v614, 96
    %v617 = vpop.permute.xlu0 %616
    %v618 = vsel %vm159, %v617, 0
    %620 = vmatpush.msra.mxu0 0.0
    %621 = vmatpush.msra.mxu0 0.0
    %622 = vmatpush.msra.mxu0 0.0
    %623 = vmatpush.msra.mxu0 0.0
    %624 = vmatpush.msra.mxu0 0.0
    %625 = vmatpush.msra.mxu0 0.0
    %626 = vmatpush.msra.mxu0 0.0
    %627 = vmatpush.msra.mxu0 0.0
    %628 = vmatpush.msra.mxu0 0.0
    %629 = vmatpush.msra.mxu0 0.0
    %630 = vmatpush.msra.mxu0 0.0
    %631 = vmatpush.msra.mxu0 0.0
    %632 = vmatpush.msra.mxu0 %v228
    %633 = vmatpush.msra.mxu0 %v227
    %634 = vmatpush.msra.mxu0 %v226
    %635 = vmatpush.msra.mxu0 %v225
    %636 = vmatmul.f32.gmra.mxu0 %v618
    %v637 = vpop.f32.mrf.mxu0
    %v638 = vadd.f32 %v231, %v637
    %639 = vdwg.mxu0
    %v640 = vadd.f32 %v220, %v638
    %v641 = vxor.u32 %v640, 2147483648
    %v642 = vmul.f32 %v641, 1.442695
    %v643 = vpow.pop %v642
    %v644 = vadd.f32 %v643, 1.0
    %v645 = vrcp.pop %v644
    %v646 = vmul.f32 %v644, %v645
    %v647 = vsub.f32 1.0, %v646
    %v648 = vmul.f32 %v645, %v647
    %v649 = vadd.f32 %v645, %v648
    %vm650 = vweird.f32 %v644
    %vm651 = vweird.f32 %v645
    %vm652 = vmor %vm650, %vm651
    %v653 = vsel %vm652, %v645, %v649
    %v654 = vand.u32 2147483647, %v644
    %vm655 = vcmp.eq.f32.partialorder %v654, 8.507059e+37
    %v656 = vand.u32 %v644, 2147483648
    %v657 = vor.u32 1.1754944e-38, %v656
    %v658 = vsel %vm655, %v657, %v653
    %v659 = vmul.f32 1.0, %v658
    %661 = vrot.lane.b32.xlu0 %v638, 64
    %v662 = vpop.permute.xlu0 %661
    %v664 = vmul.f32 %v659, %v662
    %666 = vrot.lane.b32.xlu0 %v664, 64
    %v667 = vpop.permute.xlu0 %666
    %v669 = vadd.f32 %v220, %v667
    %v670 = vtanh.pop %v669
    %v671 = vsub.f32 1.0, %v659
    %673 = vrot.lane.b32.xlu0 %v670, 96
    %v674 = vpop.permute.xlu0 %673
    %v676 = vmul.f32 %v671, %v674
    %v677 = vmul.f32 %v659, %v614
    %v678 = vadd.f32 %v676, %v677
    %680 = vrot.lane.b32.xlu0 %v678, 96
    %v681 = vpop.permute.xlu0 %680
    %v682 = vsel %vm159, %v681, 0
    %684 = vmatpush.msra.mxu0 0.0
    %685 = vmatpush.msra.mxu0 0.0
    %686 = vmatpush.msra.mxu0 0.0
    %687 = vmatpush.msra.mxu0 0.0
    %688 = vmatpush.msra.mxu0 0.0
    %689 = vmatpush.msra.mxu0 0.0
    %690 = vmatpush.msra.mxu0 0.0
    %691 = vmatpush.msra.mxu0 0.0
    %692 = vmatpush.msra.mxu0 0.0
    %693 = vmatpush.msra.mxu0 0.0
    %694 = vmatpush.msra.mxu0 0.0
    %695 = vmatpush.msra.mxu0 0.0
    %696 = vmatpush.msra.mxu0 %v228
    %697 = vmatpush.msra.mxu0 %v227
    %698 = vmatpush.msra.mxu0 %v226
    %699 = vmatpush.msra.mxu0 %v225
    %700 = vmatmul.f32.gmra.mxu0 %v682
    %v701 = vpop.f32.mrf.mxu0
    %v702 = vadd.f32 %v231, %v701
    %703 = vdwg.mxu0
    %v704 = vadd.f32 %v223, %v702
    %v705 = vxor.u32 %v704, 2147483648
    %v706 = vmul.f32 %v705, 1.442695
    %v707 = vpow.pop %v706
    %v708 = vadd.f32 %v707, 1.0
    %v709 = vrcp.pop %v708
    %v710 = vmul.f32 %v708, %v709
    %v711 = vsub.f32 1.0, %v710
    %v712 = vmul.f32 %v709, %v711
    %v713 = vadd.f32 %v709, %v712
    %vm714 = vweird.f32 %v708
    %vm715 = vweird.f32 %v709
    %vm716 = vmor %vm714, %vm715
    %v717 = vsel %vm716, %v709, %v713
    %v718 = vand.u32 2147483647, %v708
    %vm719 = vcmp.eq.f32.partialorder %v718, 8.507059e+37
    %v720 = vand.u32 %v708, 2147483648
    %v721 = vor.u32 1.1754944e-38, %v720
    %v722 = vsel %vm719, %v721, %v717
    %v723 = vmul.f32 1.0, %v722
    %725 = vrot.lane.b32.xlu0 %v702, 64
    %v726 = vpop.permute.xlu0 %725
    %v728 = vmul.f32 %v723, %v726
    %730 = vrot.lane.b32.xlu0 %v728, 64
    %v731 = vpop.permute.xlu0 %730
    %v733 = vadd.f32 %v223, %v731
    %v734 = vtanh.pop %v733
    %v735 = vsub.f32 1.0, %v723
    %737 = vrot.lane.b32.xlu0 %v734, 96
    %v738 = vpop.permute.xlu0 %737
    %v740 = vmul.f32 %v735, %v738
    %v741 = vmul.f32 %v723, %v678
    %v742 = vadd.f32 %v740, %v741
    %v743 = vld [vmem:[%s10] sm:$0x7]
    %v744 = vld [vmem:[%s11] sm:$0x3]
    %v745 = vld [vmem:[%s1] sm:$0xff]
    %v746 = vld [vmem:[%s1 + $0x8] sm:$0xff]
    %v747 = vld [vmem:[%s1 + $0x10] sm:$0xff]
    %v748 = vld [vmem:[%s1 + $0x18] sm:$0xff]
    %v749 = vld [vmem:[%s1 + $0x20] sm:$0xff]
    %v750 = vld [vmem:[%s1 + $0x28] sm:$0xff]
    %v751 = vld [vmem:[%s1 + $0x30] sm:$0xff]
    %v752 = vld [vmem:[%s1 + $0x38] sm:$0xff]
    %v753 = vld [vmem:[%s1 + $0x40] sm:$0xff]
    %v754 = vld [vmem:[%s1 + $0x48] sm:$0xff]
    %v755 = vld [vmem:[%s1 + $0x50] sm:$0xff]
    %v756 = vld [vmem:[%s1 + $0x58] sm:$0xff]
    %v757 = vld [vmem:[%s1 + $0x60] sm:$0xff]
    %v758 = vld [vmem:[%s1 + $0x68] sm:$0xff]
    %v759 = vld [vmem:[%s1 + $0x70] sm:$0xff]
    %v760 = vld [vmem:[%s1 + $0x78] sm:$0xff]
    %v761 = vld [vmem:[#allocation7] sm:$0xff]
    %v762 = vld [vmem:[#allocation7 + $0x8] sm:$0xff]
    %v763 = vld [vmem:[#allocation7 + $0x10] sm:$0xff]
    %v764 = vld [vmem:[#allocation7 + $0x18] sm:$0xff]
    %v765 = vperm.slane %v743, 0
    %v767 = vsel %vm159, %v745, 0
    %v770 = vsel %vm159, %v746, 0
    %v773 = vsel %vm159, %v747, 0
    %v776 = vsel %vm159, %v748, 0
    %v779 = vsel %vm159, %v749, 0
    %v782 = vsel %vm159, %v750, 0
    %v785 = vsel %vm159, %v751, 0
    %v788 = vsel %vm159, %v752, 0
    %v791 = vsel %vm159, %v753, 0
    %v794 = vsel %vm159, %v754, 0
    %v797 = vsel %vm159, %v755, 0
    %v800 = vsel %vm159, %v756, 0
    %v803 = vsel %vm159, %v757, 0
    %v806 = vsel %vm159, %v758, 0
    %v809 = vsel %vm159, %v759, 0
    %v812 = vsel %vm159, %v760, 0
    %814 = vmatpush.msra.mxu0 0.0
    %815 = vmatpush.msra.mxu0 0.0
    %816 = vmatpush.msra.mxu0 0.0
    %817 = vmatpush.msra.mxu0 0.0
    %818 = vmatpush.msra.mxu0 0.0
    %819 = vmatpush.msra.mxu0 0.0
    %820 = vmatpush.msra.mxu0 0.0
    %821 = vmatpush.msra.mxu0 0.0
    %822 = vmatpush.msra.mxu0 0.0
    %823 = vmatpush.msra.mxu0 0.0
    %824 = vmatpush.msra.mxu0 0.0
    %825 = vmatpush.msra.mxu0 0.0
    %826 = vmatpush.msra.mxu0 %v764
    %827 = vmatpush.msra.mxu0 %v763
    %828 = vmatpush.msra.mxu0 %v762
    %829 = vmatpush.msra.mxu0 %v761
    %830 = vmatmul.f32.gmra.mxu0 %v767
    %v831 = vpop.f32.mrf.mxu0
    %v832 = vadd.f32 %v765, %v831
    %833 = vmatmul.f32.gmra.mxu0 %v770
    %v834 = vpop.f32.mrf.mxu0
    %v835 = vadd.f32 %v765, %v834
    %836 = vmatmul.f32.gmra.mxu0 %v773
    %v837 = vpop.f32.mrf.mxu0
    %v838 = vadd.f32 %v765, %v837
    %839 = vmatmul.f32.gmra.mxu0 %v776
    %v840 = vpop.f32.mrf.mxu0
    %v841 = vadd.f32 %v765, %v840
    %842 = vmatmul.f32.gmra.mxu0 %v779
    %v843 = vpop.f32.mrf.mxu0
    %v844 = vadd.f32 %v765, %v843
    %845 = vmatmul.f32.gmra.mxu0 %v782
    %v846 = vpop.f32.mrf.mxu0
    %v847 = vadd.f32 %v765, %v846
    %848 = vmatmul.f32.gmra.mxu0 %v785
    %v849 = vpop.f32.mrf.mxu0
    %v850 = vadd.f32 %v765, %v849
    %851 = vmatmul.f32.gmra.mxu0 %v788
    %v852 = vpop.f32.mrf.mxu0
    %v853 = vadd.f32 %v765, %v852
    %854 = vmatmul.f32.gmra.mxu0 %v791
    %v855 = vpop.f32.mrf.mxu0
    %v856 = vadd.f32 %v765, %v855
    %857 = vmatmul.f32.gmra.mxu0 %v794
    %v858 = vpop.f32.mrf.mxu0
    %v859 = vadd.f32 %v765, %v858
    %860 = vmatmul.f32.gmra.mxu0 %v797
    %v861 = vpop.f32.mrf.mxu0
    %v862 = vadd.f32 %v765, %v861
    %863 = vmatmul.f32.gmra.mxu0 %v800
    %v864 = vpop.f32.mrf.mxu0
    %v865 = vadd.f32 %v765, %v864
    %866 = vmatmul.f32.gmra.mxu0 %v803
    %v867 = vpop.f32.mrf.mxu0
    %v868 = vadd.f32 %v765, %v867
    %869 = vmatmul.f32.gmra.mxu0 %v806
    %v870 = vpop.f32.mrf.mxu0
    %v871 = vadd.f32 %v765, %v870
    %872 = vmatmul.f32.gmra.mxu0 %v809
    %v873 = vpop.f32.mrf.mxu0
    %v874 = vadd.f32 %v765, %v873
    %875 = vmatmul.f32.gmra.mxu0 %v812
    %v876 = vpop.f32.mrf.mxu0
    %v877 = vadd.f32 %v765, %v876
    %878 = vdwg.mxu0
    %v879 = vmax.f32 %v832, 0.0
    %v880 = vmax.f32 %v835, 0.0
    %v881 = vmax.f32 %v838, 0.0
    %v882 = vmax.f32 %v841, 0.0
    %v883 = vmax.f32 %v844, 0.0
    %v884 = vmax.f32 %v847, 0.0
    %v885 = vmax.f32 %v850, 0.0
    %v886 = vmax.f32 %v853, 0.0
    %v887 = vmax.f32 %v856, 0.0
    %v888 = vmax.f32 %v859, 0.0
    %v889 = vmax.f32 %v862, 0.0
    %v890 = vmax.f32 %v865, 0.0
    %v891 = vmax.f32 %v868, 0.0
    %v892 = vmax.f32 %v871, 0.0
    %v893 = vmax.f32 %v874, 0.0
    %v894 = vmax.f32 %v877, 0.0
    %v895 = vld [vmem:[#allocation8] sm:$0xff]
    %v896 = vld [vmem:[#allocation8 + $0x8] sm:$0xff]
    %v897 = vld [vmem:[#allocation8 + $0x10] sm:$0xff]
    %v898 = vld [vmem:[#allocation8 + $0x18] sm:$0xff]
    %v899 = vperm.slane %v744, 0
    %901 = vrot.lane.b32.xlu0 %v742, 96
    %v902 = vpop.permute.xlu0 %901
    %v903 = vsel %vm159, %v902, 0
    %905 = vmatpush.msra.mxu0 0.0
    %906 = vmatpush.msra.mxu0 0.0
    %907 = vmatpush.msra.mxu0 0.0
    %908 = vmatpush.msra.mxu0 0.0
    %909 = vmatpush.msra.mxu0 0.0
    %910 = vmatpush.msra.mxu0 0.0
    %911 = vmatpush.msra.mxu0 0.0
    %912 = vmatpush.msra.mxu0 0.0
    %913 = vmatpush.msra.mxu0 0.0
    %914 = vmatpush.msra.mxu0 0.0
    %915 = vmatpush.msra.mxu0 0.0
    %916 = vmatpush.msra.mxu0 0.0
    %917 = vmatpush.msra.mxu0 %v898
    %918 = vmatpush.msra.mxu0 %v897
    %919 = vmatpush.msra.mxu0 %v896
    %920 = vmatpush.msra.mxu0 %v895
    %921 = vmatmul.f32.gmra.mxu0 %v903
    %v922 = vpop.f32.mrf.mxu0
    %v923 = vadd.f32 %v899, %v922
    %924 = vdwg.mxu0
    %v925 = vmax.f32 %v923, 0.0
    %v926 = vperm.slane %v743, 2
    %v927 = vmul.f32 %v925, %v926
    %v929 = vrot.slane %v927, 1
    %v930 = vrot.slane %v927, 2
    %v931 = vrot.slane %v927, 3
    %v932 = vrot.slane %v927, 4
    %v933 = vrot.slane %v927, 5
    %v934 = vrot.slane %v927, 6
    %v935 = vrot.slane %v927, 7
    %v936 = vsel %vm159, %v927, 0
    %v939 = vsel %vm159, %v879, 0
    %v942 = vsel %vm159, %v880, 0
    %944 = vmatpush.xpose.msra.mxu0 0.0
    %945 = vmatpush.xpose.msra.mxu0 0.0
    %946 = vmatpush.xpose.msra.mxu0 0.0
    %947 = vmatpush.xpose.msra.mxu0 0.0
    %948 = vmatpush.xpose.msra.mxu0 0.0
    %949 = vmatpush.xpose.msra.mxu0 0.0
    %950 = vmatpush.xpose.msra.mxu0 0.0
    %951 = vmatpush.xpose.msra.mxu0 0.0
    %952 = vmatpush.xpose.msra.mxu0 0.0
    %953 = vmatpush.xpose.msra.mxu0 0.0
    %954 = vmatpush.xpose.msra.mxu0 0.0
    %955 = vmatpush.xpose.msra.mxu0 0.0
    %956 = vmatpush.xpose.msra.mxu0 0.0
    %957 = vmatpush.xpose.msra.mxu0 0.0
    %958 = vmatpush.xpose.msra.mxu0 %v942
    %959 = vmatpush.xpose.msra.mxu0 %v939
    %960 = vmatmul.f32.gmra.mxu0 %v936
    %v961 = vpop.f32.mrf.mxu0
    %v962 = vadd.f32 0.0, %v961
    %963 = vdwg.mxu0
    %v964 = vsel %vm159, %v929, 0
    %v967 = vsel %vm159, %v881, 0
    %v970 = vsel %vm159, %v882, 0
    %972 = vmatpush.xpose.msra.mxu0 0.0
    %973 = vmatpush.xpose.msra.mxu0 0.0
    %974 = vmatpush.xpose.msra.mxu0 0.0
    %975 = vmatpush.xpose.msra.mxu0 0.0
    %976 = vmatpush.xpose.msra.mxu0 0.0
    %977 = vmatpush.xpose.msra.mxu0 0.0
    %978 = vmatpush.xpose.msra.mxu0 0.0
    %979 = vmatpush.xpose.msra.mxu0 0.0
    %980 = vmatpush.xpose.msra.mxu0 0.0
    %981 = vmatpush.xpose.msra.mxu0 0.0
    %982 = vmatpush.xpose.msra.mxu0 0.0
    %983 = vmatpush.xpose.msra.mxu0 0.0
    %984 = vmatpush.xpose.msra.mxu0 0.0
    %985 = vmatpush.xpose.msra.mxu0 0.0
    %986 = vmatpush.xpose.msra.mxu0 %v970
    %987 = vmatpush.xpose.msra.mxu0 %v967
    %988 = vmatmul.f32.gmra.mxu0 %v964
    %v989 = vpop.f32.mrf.mxu0
    %v990 = vadd.f32 0.0, %v989
    %991 = vdwg.mxu0
    %v992 = vsel %vm159, %v930, 0
    %v995 = vsel %vm159, %v883, 0
    %v998 = vsel %vm159, %v884, 0
    %1000 = vmatpush.xpose.msra.mxu0 0.0
    %1001 = vmatpush.xpose.msra.mxu0 0.0
    %1002 = vmatpush.xpose.msra.mxu0 0.0
    %1003 = vmatpush.xpose.msra.mxu0 0.0
    %1004 = vmatpush.xpose.msra.mxu0 0.0
    %1005 = vmatpush.xpose.msra.mxu0 0.0
    %1006 = vmatpush.xpose.msra.mxu0 0.0
    %1007 = vmatpush.xpose.msra.mxu0 0.0
    %1008 = vmatpush.xpose.msra.mxu0 0.0
    %1009 = vmatpush.xpose.msra.mxu0 0.0
    %1010 = vmatpush.xpose.msra.mxu0 0.0
    %1011 = vmatpush.xpose.msra.mxu0 0.0
    %1012 = vmatpush.xpose.msra.mxu0 0.0
    %1013 = vmatpush.xpose.msra.mxu0 0.0
    %1014 = vmatpush.xpose.msra.mxu0 %v998
    %1015 = vmatpush.xpose.msra.mxu0 %v995
    %1016 = vmatmul.f32.gmra.mxu0 %v992
    %v1017 = vpop.f32.mrf.mxu0
    %v1018 = vadd.f32 0.0, %v1017
    %1019 = vdwg.mxu0
    %v1020 = vsel %vm159, %v931, 0
    %v1023 = vsel %vm159, %v885, 0
    %v1026 = vsel %vm159, %v886, 0
    %1028 = vmatpush.xpose.msra.mxu0 0.0
    %1029 = vmatpush.xpose.msra.mxu0 0.0
    %1030 = vmatpush.xpose.msra.mxu0 0.0
    %1031 = vmatpush.xpose.msra.mxu0 0.0
    %1032 = vmatpush.xpose.msra.mxu0 0.0
    %1033 = vmatpush.xpose.msra.mxu0 0.0
    %1034 = vmatpush.xpose.msra.mxu0 0.0
    %1035 = vmatpush.xpose.msra.mxu0 0.0
    %1036 = vmatpush.xpose.msra.mxu0 0.0
    %1037 = vmatpush.xpose.msra.mxu0 0.0
    %1038 = vmatpush.xpose.msra.mxu0 0.0
    %1039 = vmatpush.xpose.msra.mxu0 0.0
    %1040 = vmatpush.xpose.msra.mxu0 0.0
    %1041 = vmatpush.xpose.msra.mxu0 0.0
    %1042 = vmatpush.xpose.msra.mxu0 %v1026
    %1043 = vmatpush.xpose.msra.mxu0 %v1023
    %1044 = vmatmul.f32.gmra.mxu0 %v1020
    %v1045 = vpop.f32.mrf.mxu0
    %v1046 = vadd.f32 0.0, %v1045
    %1047 = vdwg.mxu0
    %v1048 = vsel %vm159, %v932, 0
    %v1051 = vsel %vm159, %v887, 0
    %v1054 = vsel %vm159, %v888, 0
    %1056 = vmatpush.xpose.msra.mxu0 0.0
    %1057 = vmatpush.xpose.msra.mxu0 0.0
    %1058 = vmatpush.xpose.msra.mxu0 0.0
    %1059 = vmatpush.xpose.msra.mxu0 0.0
    %1060 = vmatpush.xpose.msra.mxu0 0.0
    %1061 = vmatpush.xpose.msra.mxu0 0.0
    %1062 = vmatpush.xpose.msra.mxu0 0.0
    %1063 = vmatpush.xpose.msra.mxu0 0.0
    %1064 = vmatpush.xpose.msra.mxu0 0.0
    %1065 = vmatpush.xpose.msra.mxu0 0.0
    %1066 = vmatpush.xpose.msra.mxu0 0.0
    %1067 = vmatpush.xpose.msra.mxu0 0.0
    %1068 = vmatpush.xpose.msra.mxu0 0.0
    %1069 = vmatpush.xpose.msra.mxu0 0.0
    %1070 = vmatpush.xpose.msra.mxu0 %v1054
    %1071 = vmatpush.xpose.msra.mxu0 %v1051
    %1072 = vmatmul.f32.gmra.mxu0 %v1048
    %v1073 = vpop.f32.mrf.mxu0
    %v1074 = vadd.f32 0.0, %v1073
    %1075 = vdwg.mxu0
    %v1076 = vsel %vm159, %v933, 0
    %v1079 = vsel %vm159, %v889, 0
    %v1082 = vsel %vm159, %v890, 0
    %1084 = vmatpush.xpose.msra.mxu0 0.0
    %1085 = vmatpush.xpose.msra.mxu0 0.0
    %1086 = vmatpush.xpose.msra.mxu0 0.0
    %1087 = vmatpush.xpose.msra.mxu0 0.0
    %1088 = vmatpush.xpose.msra.mxu0 0.0
    %1089 = vmatpush.xpose.msra.mxu0 0.0
    %1090 = vmatpush.xpose.msra.mxu0 0.0
    %1091 = vmatpush.xpose.msra.mxu0 0.0
    %1092 = vmatpush.xpose.msra.mxu0 0.0
    %1093 = vmatpush.xpose.msra.mxu0 0.0
    %1094 = vmatpush.xpose.msra.mxu0 0.0
    %1095 = vmatpush.xpose.msra.mxu0 0.0
    %1096 = vmatpush.xpose.msra.mxu0 0.0
    %1097 = vmatpush.xpose.msra.mxu0 0.0
    %1098 = vmatpush.xpose.msra.mxu0 %v1082
    %1099 = vmatpush.xpose.msra.mxu0 %v1079
    %1100 = vmatmul.f32.gmra.mxu0 %v1076
    %v1101 = vpop.f32.mrf.mxu0
    %v1102 = vadd.f32 0.0, %v1101
    %1103 = vdwg.mxu0
    %v1104 = vsel %vm159, %v934, 0
    %v1107 = vsel %vm159, %v891, 0
    %v1110 = vsel %vm159, %v892, 0
    %1112 = vmatpush.xpose.msra.mxu0 0.0
    %1113 = vmatpush.xpose.msra.mxu0 0.0
    %1114 = vmatpush.xpose.msra.mxu0 0.0
    %1115 = vmatpush.xpose.msra.mxu0 0.0
    %1116 = vmatpush.xpose.msra.mxu0 0.0
    %1117 = vmatpush.xpose.msra.mxu0 0.0
    %1118 = vmatpush.xpose.msra.mxu0 0.0
    %1119 = vmatpush.xpose.msra.mxu0 0.0
    %1120 = vmatpush.xpose.msra.mxu0 0.0
    %1121 = vmatpush.xpose.msra.mxu0 0.0
    %1122 = vmatpush.xpose.msra.mxu0 0.0
    %1123 = vmatpush.xpose.msra.mxu0 0.0
    %1124 = vmatpush.xpose.msra.mxu0 0.0
    %1125 = vmatpush.xpose.msra.mxu0 0.0
    %1126 = vmatpush.xpose.msra.mxu0 %v1110
    %1127 = vmatpush.xpose.msra.mxu0 %v1107
    %1128 = vmatmul.f32.gmra.mxu0 %v1104
    %v1129 = vpop.f32.mrf.mxu0
    %v1130 = vadd.f32 0.0, %v1129
    %1131 = vdwg.mxu0
    %v1132 = vsel %vm159, %v935, 0
    %v1135 = vsel %vm159, %v893, 0
    %v1138 = vsel %vm159, %v894, 0
    %1140 = vmatpush.xpose.msra.mxu0 0.0
    %1141 = vmatpush.xpose.msra.mxu0 0.0
    %1142 = vmatpush.xpose.msra.mxu0 0.0
    %1143 = vmatpush.xpose.msra.mxu0 0.0
    %1144 = vmatpush.xpose.msra.mxu0 0.0
    %1145 = vmatpush.xpose.msra.mxu0 0.0
    %1146 = vmatpush.xpose.msra.mxu0 0.0
    %1147 = vmatpush.xpose.msra.mxu0 0.0
    %1148 = vmatpush.xpose.msra.mxu0 0.0
    %1149 = vmatpush.xpose.msra.mxu0 0.0
    %1150 = vmatpush.xpose.msra.mxu0 0.0
    %1151 = vmatpush.xpose.msra.mxu0 0.0
    %1152 = vmatpush.xpose.msra.mxu0 0.0
    %1153 = vmatpush.xpose.msra.mxu0 0.0
    %1154 = vmatpush.xpose.msra.mxu0 %v1138
    %1155 = vmatpush.xpose.msra.mxu0 %v1135
    %1156 = vmatmul.f32.gmra.mxu0 %v1132
    %v1157 = vpop.f32.mrf.mxu0
    %v1158 = vadd.f32 0.0, %v1157
    %1159 = vdwg.mxu0
    %v1168 = vrot.slane %v990, 7
    %vm1169 = vcmask 1041409
    %v1170 = vsel %vm1169, %v1168, %v962
    %v1171 = vrot.slane %v1018, 6
    %vm1172 = vcmask 1042434
    %v1173 = vsel %vm1172, %v1171, %v1170
    %v1174 = vrot.slane %v1046, 5
    %vm1175 = vcmask 1043459
    %v1176 = vsel %vm1175, %v1174, %v1173
    %v1177 = vrot.slane %v1074, 4
    %vm1178 = vcmask 1044484
    %v1179 = vsel %vm1178, %v1177, %v1176
    %v1180 = vrot.slane %v1102, 3
    %vm1181 = vcmask 1045509
    %v1182 = vsel %vm1181, %v1180, %v1179
    %v1183 = vrot.slane %v1130, 2
    %vm1184 = vcmask 1046534
    %v1185 = vsel %vm1184, %v1183, %v1182
    %v1186 = vrot.slane %v1158, 1
    %vm1187 = vcmask 1047559
    %v1188 = vsel %vm1187, %v1186, %v1185
    %vm1190 = vcmask 130048
    %v1191 = vsel %vm1190, %v1188, -inf
    %1192 = vmax.xlane.f32.xlu0 %v1191
    %v1193 = vpop.xlane.xlu0 %1192
    %v1195 = vrot.slane %v1193, 1
    %v1196 = vrot.slane %v1193, 2
    %v1197 = vrot.slane %v1193, 3
    %v1198 = vrot.slane %v1193, 4
    %v1199 = vrot.slane %v1193, 5
    %v1200 = vrot.slane %v1193, 6
    %v1201 = vrot.slane %v1193, 7
    %v1210 = vsub.f32 %v962, %v1193
    %v1211 = vsub.f32 %v990, %v1195
    %v1212 = vsub.f32 %v1018, %v1196
    %v1213 = vsub.f32 %v1046, %v1197
    %v1214 = vsub.f32 %v1074, %v1198
    %v1215 = vsub.f32 %v1102, %v1199
    %v1216 = vsub.f32 %v1130, %v1200
    %v1217 = vsub.f32 %v1158, %v1201
    %v1218 = vmul.f32 %v1210, 1.442695
    %v1219 = vpow.pop %v1218
    %v1220 = vmul.f32 %v1211, 1.442695
    %v1221 = vpow.pop %v1220
    %v1222 = vmul.f32 %v1212, 1.442695
    %v1223 = vpow.pop %v1222
    %v1224 = vmul.f32 %v1213, 1.442695
    %v1225 = vpow.pop %v1224
    %v1226 = vmul.f32 %v1214, 1.442695
    %v1227 = vpow.pop %v1226
    %v1228 = vmul.f32 %v1215, 1.442695
    %v1229 = vpow.pop %v1228
    %v1230 = vmul.f32 %v1216, 1.442695
    %v1231 = vpow.pop %v1230
    %v1232 = vmul.f32 %v1217, 1.442695
    %v1233 = vpow.pop %v1232
    %v1242 = vrot.slane %v1221, 7
    %v1243 = vsel %vm1169, %v1242, %v1219
    %v1244 = vrot.slane %v1223, 6
    %v1245 = vsel %vm1172, %v1244, %v1243
    %v1246 = vrot.slane %v1225, 5
    %v1247 = vsel %vm1175, %v1246, %v1245
    %v1248 = vrot.slane %v1227, 4
    %v1249 = vsel %vm1178, %v1248, %v1247
    %v1250 = vrot.slane %v1229, 3
    %v1251 = vsel %vm1181, %v1250, %v1249
    %v1252 = vrot.slane %v1231, 2
    %v1253 = vsel %vm1184, %v1252, %v1251
    %v1254 = vrot.slane %v1233, 1
    %v1255 = vsel %vm1187, %v1254, %v1253
    %v1257 = vsel %vm1190, %v1255, 0.0
    %1258 = vadd.xlane.f32.xlu0 %v1257
    %v1259 = vpop.xlane.xlu0 %1258
    %v1260 = vrcp.pop %v1259
    %v1262 = vrot.slane %v1260, 1
    %v1263 = vrot.slane %v1260, 2
    %v1264 = vrot.slane %v1260, 3
    %v1265 = vrot.slane %v1260, 4
    %v1266 = vrot.slane %v1260, 5
    %v1267 = vrot.slane %v1260, 6
    %v1268 = vrot.slane %v1260, 7
    %v1277 = vmul.f32 %v1219, %v1260
    %v1278 = vmul.f32 %v1221, %v1262
    %v1279 = vmul.f32 %v1223, %v1263
    %v1280 = vmul.f32 %v1225, %v1264
    %v1281 = vmul.f32 %v1227, %v1265
    %v1282 = vmul.f32 %v1229, %v1266
    %v1283 = vmul.f32 %v1231, %v1267
    %v1284 = vmul.f32 %v1233, %v1268
    %v1285 = vld [vmem:[%s2] sm:$0xff]
    %v1286 = vld [vmem:[%s2 + $0x8] sm:$0xff]
    %v1287 = vld [vmem:[%s2 + $0x10] sm:$0xff]
    %v1288 = vld [vmem:[%s2 + $0x18] sm:$0xff]
    %v1289 = vld [vmem:[%s2 + $0x20] sm:$0xff]
    %v1290 = vld [vmem:[%s2 + $0x28] sm:$0xff]
    %v1291 = vld [vmem:[%s2 + $0x30] sm:$0xff]
    %v1292 = vld [vmem:[%s2 + $0x38] sm:$0xff]
    %v1293 = vld [vmem:[%s2 + $0x40] sm:$0xff]
    %v1294 = vld [vmem:[%s2 + $0x48] sm:$0xff]
    %v1295 = vld [vmem:[%s2 + $0x50] sm:$0xff]
    %v1296 = vld [vmem:[%s2 + $0x58] sm:$0xff]
    %v1297 = vld [vmem:[%s2 + $0x60] sm:$0xff]
    %v1298 = vld [vmem:[%s2 + $0x68] sm:$0xff]
    %v1299 = vld [vmem:[%s2 + $0x70] sm:$0xff]
    %v1300 = vld [vmem:[%s2 + $0x78] sm:$0xff]
    %v1302 = vsel %vm1190, %v1277, 0
    %1304 = vmatpush.msra.mxu0 0.0
    %1305 = vmatpush.msra.mxu0 0.0
    %1306 = vmatpush.msra.mxu0 0.0
    %1307 = vmatpush.msra.mxu0 0.0
    %1308 = vmatpush.msra.mxu0 0.0
    %1309 = vmatpush.msra.mxu0 0.0
    %1310 = vmatpush.msra.mxu0 0.0
    %1311 = vmatpush.msra.mxu0 0.0
    %1312 = vmatpush.msra.mxu0 0.0
    %1313 = vmatpush.msra.mxu0 0.0
    %1314 = vmatpush.msra.mxu0 0.0
    %1315 = vmatpush.msra.mxu0 0.0
    %1316 = vmatpush.msra.mxu0 0.0
    %1317 = vmatpush.msra.mxu0 0.0
    %1318 = vmatpush.msra.mxu0 %v1286
    %1319 = vmatpush.msra.mxu0 %v1285
    %1320 = vmatmul.f32.gmra.mxu0 %v1302
    %v1321 = vpop.f32.mrf.mxu0
    %v1322 = vadd.f32 0.0, %v1321
    %1323 = vdwg.mxu0
    %v1325 = vsel %vm1190, %v1278, 0
    %1327 = vmatpush.msra.mxu0 0.0
    %1328 = vmatpush.msra.mxu0 0.0
    %1329 = vmatpush.msra.mxu0 0.0
    %1330 = vmatpush.msra.mxu0 0.0
    %1331 = vmatpush.msra.mxu0 0.0
    %1332 = vmatpush.msra.mxu0 0.0
    %1333 = vmatpush.msra.mxu0 0.0
    %1334 = vmatpush.msra.mxu0 0.0
    %1335 = vmatpush.msra.mxu0 0.0
    %1336 = vmatpush.msra.mxu0 0.0
    %1337 = vmatpush.msra.mxu0 0.0
    %1338 = vmatpush.msra.mxu0 0.0
    %1339 = vmatpush.msra.mxu0 0.0
    %1340 = vmatpush.msra.mxu0 0.0
    %1341 = vmatpush.msra.mxu0 %v1288
    %1342 = vmatpush.msra.mxu0 %v1287
    %1343 = vmatmul.f32.gmra.mxu0 %v1325
    %v1344 = vpop.f32.mrf.mxu0
    %v1345 = vadd.f32 0.0, %v1344
    %1346 = vdwg.mxu0
    %v1348 = vsel %vm1190, %v1279, 0
    %1350 = vmatpush.msra.mxu0 0.0
    %1351 = vmatpush.msra.mxu0 0.0
    %1352 = vmatpush.msra.mxu0 0.0
    %1353 = vmatpush.msra.mxu0 0.0
    %1354 = vmatpush.msra.mxu0 0.0
    %1355 = vmatpush.msra.mxu0 0.0
    %1356 = vmatpush.msra.mxu0 0.0
    %1357 = vmatpush.msra.mxu0 0.0
    %1358 = vmatpush.msra.mxu0 0.0
    %1359 = vmatpush.msra.mxu0 0.0
    %1360 = vmatpush.msra.mxu0 0.0
    %1361 = vmatpush.msra.mxu0 0.0
    %1362 = vmatpush.msra.mxu0 0.0
    %1363 = vmatpush.msra.mxu0 0.0
    %1364 = vmatpush.msra.mxu0 %v1290
    %1365 = vmatpush.msra.mxu0 %v1289
    %1366 = vmatmul.f32.gmra.mxu0 %v1348
    %v1367 = vpop.f32.mrf.mxu0
    %v1368 = vadd.f32 0.0, %v1367
    %1369 = vdwg.mxu0
    %v1371 = vsel %vm1190, %v1280, 0
    %1373 = vmatpush.msra.mxu0 0.0
    %1374 = vmatpush.msra.mxu0 0.0
    %1375 = vmatpush.msra.mxu0 0.0
    %1376 = vmatpush.msra.mxu0 0.0
    %1377 = vmatpush.msra.mxu0 0.0
    %1378 = vmatpush.msra.mxu0 0.0
    %1379 = vmatpush.msra.mxu0 0.0
    %1380 = vmatpush.msra.mxu0 0.0
    %1381 = vmatpush.msra.mxu0 0.0
    %1382 = vmatpush.msra.mxu0 0.0
    %1383 = vmatpush.msra.mxu0 0.0
    %1384 = vmatpush.msra.mxu0 0.0
    %1385 = vmatpush.msra.mxu0 0.0
    %1386 = vmatpush.msra.mxu0 0.0
    %1387 = vmatpush.msra.mxu0 %v1292
    %1388 = vmatpush.msra.mxu0 %v1291
    %1389 = vmatmul.f32.gmra.mxu0 %v1371
    %v1390 = vpop.f32.mrf.mxu0
    %v1391 = vadd.f32 0.0, %v1390
    %1392 = vdwg.mxu0
    %v1394 = vsel %vm1190, %v1281, 0
    %1396 = vmatpush.msra.mxu0 0.0
    %1397 = vmatpush.msra.mxu0 0.0
    %1398 = vmatpush.msra.mxu0 0.0
    %1399 = vmatpush.msra.mxu0 0.0
    %1400 = vmatpush.msra.mxu0 0.0
    %1401 = vmatpush.msra.mxu0 0.0
    %1402 = vmatpush.msra.mxu0 0.0
    %1403 = vmatpush.msra.mxu0 0.0
    %1404 = vmatpush.msra.mxu0 0.0
    %1405 = vmatpush.msra.mxu0 0.0
    %1406 = vmatpush.msra.mxu0 0.0
    %1407 = vmatpush.msra.mxu0 0.0
    %1408 = vmatpush.msra.mxu0 0.0
    %1409 = vmatpush.msra.mxu0 0.0
    %1410 = vmatpush.msra.mxu0 %v1294
    %1411 = vmatpush.msra.mxu0 %v1293
    %1412 = vmatmul.f32.gmra.mxu0 %v1394
    %v1413 = vpop.f32.mrf.mxu0
    %v1414 = vadd.f32 0.0, %v1413
    %1415 = vdwg.mxu0
    %v1417 = vsel %vm1190, %v1282, 0
    %1419 = vmatpush.msra.mxu0 0.0
    %1420 = vmatpush.msra.mxu0 0.0
    %1421 = vmatpush.msra.mxu0 0.0
    %1422 = vmatpush.msra.mxu0 0.0
    %1423 = vmatpush.msra.mxu0 0.0
    %1424 = vmatpush.msra.mxu0 0.0
    %1425 = vmatpush.msra.mxu0 0.0
    %1426 = vmatpush.msra.mxu0 0.0
    %1427 = vmatpush.msra.mxu0 0.0
    %1428 = vmatpush.msra.mxu0 0.0
    %1429 = vmatpush.msra.mxu0 0.0
    %1430 = vmatpush.msra.mxu0 0.0
    %1431 = vmatpush.msra.mxu0 0.0
    %1432 = vmatpush.msra.mxu0 0.0
    %1433 = vmatpush.msra.mxu0 %v1296
    %1434 = vmatpush.msra.mxu0 %v1295
    %1435 = vmatmul.f32.gmra.mxu0 %v1417
    %v1436 = vpop.f32.mrf.mxu0
    %v1437 = vadd.f32 0.0, %v1436
    %1438 = vdwg.mxu0
    %v1440 = vsel %vm1190, %v1283, 0
    %1442 = vmatpush.msra.mxu0 0.0
    %1443 = vmatpush.msra.mxu0 0.0
    %1444 = vmatpush.msra.mxu0 0.0
    %1445 = vmatpush.msra.mxu0 0.0
    %1446 = vmatpush.msra.mxu0 0.0
    %1447 = vmatpush.msra.mxu0 0.0
    %1448 = vmatpush.msra.mxu0 0.0
    %1449 = vmatpush.msra.mxu0 0.0
    %1450 = vmatpush.msra.mxu0 0.0
    %1451 = vmatpush.msra.mxu0 0.0
    %1452 = vmatpush.msra.mxu0 0.0
    %1453 = vmatpush.msra.mxu0 0.0
    %1454 = vmatpush.msra.mxu0 0.0
    %1455 = vmatpush.msra.mxu0 0.0
    %1456 = vmatpush.msra.mxu0 %v1298
    %1457 = vmatpush.msra.mxu0 %v1297
    %1458 = vmatmul.f32.gmra.mxu0 %v1440
    %v1459 = vpop.f32.mrf.mxu0
    %v1460 = vadd.f32 0.0, %v1459
    %1461 = vdwg.mxu0
    %v1463 = vsel %vm1190, %v1284, 0
    %1465 = vmatpush.msra.mxu0 0.0
    %1466 = vmatpush.msra.mxu0 0.0
    %1467 = vmatpush.msra.mxu0 0.0
    %1468 = vmatpush.msra.mxu0 0.0
    %1469 = vmatpush.msra.mxu0 0.0
    %1470 = vmatpush.msra.mxu0 0.0
    %1471 = vmatpush.msra.mxu0 0.0
    %1472 = vmatpush.msra.mxu0 0.0
    %1473 = vmatpush.msra.mxu0 0.0
    %1474 = vmatpush.msra.mxu0 0.0
    %1475 = vmatpush.msra.mxu0 0.0
    %1476 = vmatpush.msra.mxu0 0.0
    %1477 = vmatpush.msra.mxu0 0.0
    %1478 = vmatpush.msra.mxu0 0.0
    %1479 = vmatpush.msra.mxu0 %v1300
    %1480 = vmatpush.msra.mxu0 %v1299
    %1481 = vmatmul.f32.gmra.mxu0 %v1463
    %v1482 = vpop.f32.mrf.mxu0
    %v1483 = vadd.f32 0.0, %v1482
    %1484 = vdwg.mxu0
    %v1485 = vld [vmem:[#allocation10] sm:$0xff]
    %v1486 = vld [vmem:[#allocation10 + $0x8] sm:$0xff]
    %v1487 = vld [vmem:[#allocation10 + $0x10] sm:$0xff]
    %v1488 = vld [vmem:[#allocation10 + $0x18] sm:$0xff]
    %v1489 = vperm.slane %v743, 1
    %v1498 = vrot.slane %v1345, 7
    %v1499 = vsel %vm1169, %v1498, %v1322
    %v1500 = vrot.slane %v1368, 6
    %v1501 = vsel %vm1172, %v1500, %v1499
    %v1502 = vrot.slane %v1391, 5
    %v1503 = vsel %vm1175, %v1502, %v1501
    %v1504 = vrot.slane %v1414, 4
    %v1505 = vsel %vm1178, %v1504, %v1503
    %v1506 = vrot.slane %v1437, 3
    %v1507 = vsel %vm1181, %v1506, %v1505
    %v1508 = vrot.slane %v1460, 2
    %v1509 = vsel %vm1184, %v1508, %v1507
    %v1510 = vrot.slane %v1483, 1
    %v1511 = vsel %vm1187, %v1510, %v1509
    %v1512 = vsel %vm159, %v1511, 0
    %1514 = vmatpush.msra.mxu0 0.0
    %1515 = vmatpush.msra.mxu0 0.0
    %1516 = vmatpush.msra.mxu0 0.0
    %1517 = vmatpush.msra.mxu0 0.0
    %1518 = vmatpush.msra.mxu0 0.0
    %1519 = vmatpush.msra.mxu0 0.0
    %1520 = vmatpush.msra.mxu0 0.0
    %1521 = vmatpush.msra.mxu0 0.0
    %1522 = vmatpush.msra.mxu0 0.0
    %1523 = vmatpush.msra.mxu0 0.0
    %1524 = vmatpush.msra.mxu0 0.0
    %1525 = vmatpush.msra.mxu0 0.0
    %1526 = vmatpush.msra.mxu0 %v1488
    %1527 = vmatpush.msra.mxu0 %v1487
    %1528 = vmatpush.msra.mxu0 %v1486
    %1529 = vmatpush.msra.mxu0 %v1485
    %1530 = vmatmul.f32.gmra.mxu0 %v1512
    %v1531 = vpop.f32.mrf.mxu0
    %v1532 = vadd.f32 %v1489, %v1531
    %1533 = vdwg.mxu0
    %v1534 = vmax.f32 %v1532, 0.0
    %1536 = vrot.lane.b32.xlu0 %v1534, 32
    %v1537 = vpop.permute.xlu0 %1536
    %v1539 = vmul.f32 %v925, %v1537
    %v1540 = vld [vmem:[#allocation11] sm:$0xff]
    %v1541 = vld [vmem:[#allocation11 + $0x8] sm:$0xff]
    %v1542 = vld [vmem:[#allocation11 + $0x10] sm:$0xff]
    %v1543 = vld [vmem:[#allocation11 + $0x18] sm:$0xff]
    %v1544 = vperm.slane %v744, 1
    %1546 = vrot.lane.b32.xlu0 %v1539, 96
    %v1547 = vpop.permute.xlu0 %1546
    %v1548 = vsel %vm159, %v1547, 0
    %1550 = vmatpush.msra.mxu0 0.0
    %1551 = vmatpush.msra.mxu0 0.0
    %1552 = vmatpush.msra.mxu0 0.0
    %1553 = vmatpush.msra.mxu0 0.0
    %1554 = vmatpush.msra.mxu0 0.0
    %1555 = vmatpush.msra.mxu0 0.0
    %1556 = vmatpush.msra.mxu0 0.0
    %1557 = vmatpush.msra.mxu0 0.0
    %1558 = vmatpush.msra.mxu0 0.0
    %1559 = vmatpush.msra.mxu0 0.0
    %1560 = vmatpush.msra.mxu0 0.0
    %1561 = vmatpush.msra.mxu0 0.0
    %1562 = vmatpush.msra.mxu0 %v1543
    %1563 = vmatpush.msra.mxu0 %v1542
    %1564 = vmatpush.msra.mxu0 %v1541
    %1565 = vmatpush.msra.mxu0 %v1540
    %1566 = vmatmul.f32.gmra.mxu0 %v1548
    %v1567 = vpop.f32.mrf.mxu0
    %v1568 = vadd.f32 %v1544, %v1567
    %1569 = vdwg.mxu0
    %v1570 = vmax.f32 %v1568, 0.0
    %v1571 = vld [vmem:[%s13] sm:$0xff]
    %v1572 = vld [vmem:[%s13 + $0x8] sm:$0xff]
    %v1573 = vld [vmem:[%s13 + $0x10] sm:$0xff]
    %v1574 = vld [vmem:[%s13 + $0x18] sm:$0xff]
    %v1575 = vld [vmem:[%s13 + $0x20] sm:$0xff]
    %v1576 = vld [vmem:[%s13 + $0x28] sm:$0xff]
    %v1577 = vld [vmem:[%s13 + $0x30] sm:$0xff]
    %v1578 = vld [vmem:[%s13 + $0x38] sm:$0xff]
    %v1579 = vld [vmem:[%s14] sm:$0x1]
    %v1581 = vperm.slane %v1579, 0
    %vm1583 = vcmask 523264
    %v1585 = vsel %vm1583, %v1570, 0
    %1587 = vmatpush.msra.mxu0 0.0
    %1588 = vmatpush.msra.mxu0 0.0
    %1589 = vmatpush.msra.mxu0 0.0
    %1590 = vmatpush.msra.mxu0 0.0
    %1591 = vmatpush.msra.mxu0 0.0
    %1592 = vmatpush.msra.mxu0 0.0
    %1593 = vmatpush.msra.mxu0 0.0
    %1594 = vmatpush.msra.mxu0 0.0
    %1595 = vmatpush.msra.mxu0 %v1578
    %1596 = vmatpush.msra.mxu0 %v1577
    %1597 = vmatpush.msra.mxu0 %v1576
    %1598 = vmatpush.msra.mxu0 %v1575
    %1599 = vmatpush.msra.mxu0 %v1574
    %1600 = vmatpush.msra.mxu0 %v1573
    %1601 = vmatpush.msra.mxu0 %v1572
    %1602 = vmatpush.msra.mxu0 %v1571
    %1603 = vmatmul.f32.gmra.mxu0 %v1585
    %v1604 = vpop.f32.mrf.mxu0
    %v1605 = vadd.f32 %v1581, %v1604
    %1606 = vdwg.mxu0
    %1607 = vst [vmem:[#allocation13] sm:$0xff] %v1605
    // Predicated region
    $region86: #{tpu_custom_call.1} parent=1 // pred_check
      _
    $region87: #{tpu_custom_call.1} parent=1 // pred_check_branch
      %1609 = sbr.rel (0) target = $region89
    $region88: #{tpu_custom_call.1} parent=1 // pred_region
      %1611 = vsyncadd [#allocation4], 0
      %s1613 = sshll.u32 [#allocation13], 4
      %s1614 = int_to_ptr.vmem [resolvable:$true] %s1613
      %s1615 = sshll.u32 %s15, 4
      %s1616 = int_to_ptr.hbm [resolvable:$true] %s1615
      %1618 = dma.vmem_to_hbm [thread:$0]  %s1614, 128, %s1616, [#allocation4]
    $region89: #{tpu_custom_call.1} parent=1 // pred_fallthru
      _
    // Predicated region
    $region90: #{tpu_custom_call.1} parent=1 // pred_check
      _
    $region91: #{tpu_custom_call.1} parent=1 // pred_check_branch
      %1620 = sbr.rel (0) target = $region93
    $region92: #{tpu_custom_call.1} parent=1 // pred_region
      %1622 = dma.done [#allocation4], 128
    $region93: #{tpu_custom_call.1} parent=1 // pred_fallthru
      _
    %1623 = vsyncpa [#allocation3], 1
    %1624 = vsyncpa [#allocation6], 1
    %1625 = vsyncpa [#allocation9], 1
    %1626 = vsyncpa [#allocation12], 1
    %1627 = vsyncpa [#allocation4], 1

</llo_original>
